<compile_context>
chip_gen: v6e
topology: v6e:2x2x1
jax: 0.10.0
libtpu: 0.0.40
codegen_flags: <defaults>
</compile_context>

<pallas_src>
import functools

import jax
import jax.numpy as jnp
from jax.experimental import pallas as pl
from jax.experimental.pallas import tpu as pltpu

HEAD_PAD = 128  # lane-dense head / output width (value lives in the last lane)


def dueling_q_kernel(
    n_actions,
    row_splits,
    x_ref,
    w1_ref, b1_ref,
    w2_ref, b2_ref,
    wb_ref, bb_ref,   # fused fc_value|fc_advantage (512, 512)
    wh_ref, bh_ref,   # fused block-diagonal heads (512, HEAD_PAD)
    q_ref,
):
    cdt = w1_ref.dtype               # compute dtype for MXU operands (bf16 or f32)
    bm = x_ref.shape[0]
    sub = bm // row_splits

    # Load each resident weight/bias exactly once.
    w1 = w1_ref[...]; b1 = b1_ref[...]
    w2 = w2_ref[...]; b2 = b2_ref[...]
    wb = wb_ref[...]; bb = bb_ref[...]
    wh = wh_ref[...]; bh = bh_ref[...]

    lane = jax.lax.broadcasted_iota(jnp.int32, (sub, HEAD_PAD), 1)
    action_mask = lane < n_actions
    inv_a = 1.0 / n_actions

    # Independent sub-tiles in one basic block -> scheduler overlaps the MXU
    # matmul of one sub-tile with the VPU (bias+ReLU+cast) work of the other.
    xs = [x_ref[pl.ds(t * sub, sub), :].astype(cdt) for t in range(row_splits)]

    # fc1 -> ReLU (dropout1 identity in eval mode)
    h1 = [jnp.maximum(jnp.dot(x, w1, preferred_element_type=jnp.float32) + b1, 0.0)
          for x in xs]
    # fc2 -> ReLU (dropout2 identity in eval mode)
    h2 = [jnp.maximum(jnp.dot(h.astype(cdt), w2, preferred_element_type=jnp.float32) + b2, 0.0)
          for h in h1]
    # fused branch layer: [fc_value | fc_advantage] -> ReLU, one 512x512 matmul
    br = [jnp.maximum(jnp.dot(h.astype(cdt), wb, preferred_element_type=jnp.float32) + bb, 0.0)
          for h in h2]
    # fused head: block-diagonal (512, HEAD_PAD) matmul.
    #   head[:, :n_actions] = advantage, head[:, -1] = value, middle lanes = 0.
    hd = [jnp.dot(h.astype(cdt), wh, preferred_element_type=jnp.float32) + bh
          for h in br]

    for t in range(row_splits):
        head = hd[t]
        val = head[:, HEAD_PAD - 1:]                        # (sub, 1) value lane
        row_sum = jnp.sum(head, axis=-1, keepdims=True)     # = sum(adv) + val (middle lanes 0)
        adv_mean = (row_sum - val) * inv_a
        q = head + (val - adv_mean)                         # valid in lanes 0..A-1
        # Zero the padded lanes so q_pad never carries garbage.
        q_ref[pl.ds(t * sub, sub), :] = jnp.where(action_mask, q, 0.0).astype(q_ref.dtype)


def fuse_params(params, n_actions, *, weights_dtype=jnp.bfloat16):
    """Fuse value/advantage branches, pad heads to a lane-dense block-diag weight.

    bf16 MXU operands are the default (f32 accumulation in-kernel, f32 biases).
    """
    assert n_actions <= HEAD_PAD - 1
    wd = weights_dtype
    hv = params["wv1"].shape[1]   # 256 (value branch width)
    ha = params["wa1"].shape[1]   # 256 (advantage branch width)

    w_head = jnp.zeros((hv + ha, HEAD_PAD), jnp.float32)
    w_head = w_head.at[:hv, HEAD_PAD - 1].set(params["wv2"][:, 0])   # value -> last lane
    w_head = w_head.at[hv:, :n_actions].set(params["wa2"])           # advantage -> lanes 0..A-1
    b_head = jnp.zeros((1, HEAD_PAD), jnp.float32)
    b_head = b_head.at[0, HEAD_PAD - 1].set(params["bv2"][0, 0])
    b_head = b_head.at[0, :n_actions].set(params["ba2"][0])

    return {
        "w1": params["w1"].astype(wd),
        "b1": params["b1"].astype(jnp.float32),
        "w2": params["w2"].astype(wd),
        "b2": params["b2"].astype(jnp.float32),
        "w_branch": jnp.concatenate([params["wv1"], params["wa1"]], axis=1).astype(wd),
        "b_branch": jnp.concatenate([params["bv1"], params["ba1"]], axis=1).astype(jnp.float32),
        "w_head": w_head.astype(wd),
        "b_head": b_head,  # f32
    }


def _choose_block_batch(batch):
    """Batch-tile selection: small batches -> one grid step (no duplicated weight
    DMA across v7x TCs); large batches -> 256/512-row tiles with grid >= 2."""
    b8 = ((batch + 7) // 8) * 8
    if b8 <= 512:
        return b8
    return 512 if b8 >= 1024 else 256


def dueling_q_forward(state, fused, n_actions, *, block_batch=None, out_dtype=jnp.float32):
    """state: (B, input_dims) f32. fused: output of fuse_params. Returns (B, n_actions)."""
    B, input_dims = state.shape
    assert fused["w1"].shape[0] == input_dims
    if block_batch is None:
        block_batch = _choose_block_batch(B)
    assert block_batch % 8 == 0  # sublane-safe

    b_pad = pl.cdiv(B, block_batch) * block_batch
    if b_pad != B:
        # TODO(synk): for ragged serving batches, mask tail rows in-kernel (scalar
        # prefetch of B) instead of this full-copy pad if latency matters.
        state = jnp.pad(state, ((0, b_pad - B), (0, 0)))
    grid = (b_pad // block_batch,)

    # Split big tiles into 2 independent sub-tiles for MXU/VPU overlap.
    row_splits = 2 if (block_batch >= 256 and block_batch % 16 == 0) else 1

    def const_spec(shape):
        # Whole-array block, same block every grid step -> weights stay resident.
        return pl.BlockSpec(shape, lambda i: (0, 0))

    in_specs = [
        pl.BlockSpec((block_batch, input_dims), lambda i: (i, 0)),  # x tile over batch
        const_spec(fused["w1"].shape), const_spec(fused["b1"].shape),
        const_spec(fused["w2"].shape), const_spec(fused["b2"].shape),
        const_spec(fused["w_branch"].shape), const_spec(fused["b_branch"].shape),
        const_spec(fused["w_head"].shape), const_spec(fused["b_head"].shape),
    ]
    out_spec = pl.BlockSpec((block_batch, HEAD_PAD), lambda i: (i, 0))

    q_pad = pl.pallas_call(
        functools.partial(dueling_q_kernel, n_actions, row_splits),
        out_shape=jax.ShapeDtypeStruct((b_pad, HEAD_PAD), out_dtype),
        grid_spec=pltpu.PrefetchScalarGridSpec(
            num_scalar_prefetch=0,
            grid=grid,
            in_specs=in_specs,
            out_specs=out_spec,
        ),
        compiler_params=pltpu.CompilerParams(
            # batch axis is parallel -> shards across both v7x TCs when grid >= 2
            dimension_semantics=("parallel",),
        ),
    )(
        state,
        fused["w1"], fused["b1"],
        fused["w2"], fused["b2"],
        fused["w_branch"], fused["b_branch"],
        fused["w_head"], fused["b_head"],
    )
    # drop batch padding and the lane padding / value lane
    return q_pad[:B, :n_actions]


def init_params(key, input_dims, n_actions):
    """Deterministic synthetic init. Weights stored as (in, out), biases as (1, out)."""
    sizes = {
        "1": (input_dims, 512),
        "2": (512, 512),
        "v1": (512, 256),
        "v2": (256, 1),
        "a1": (512, 256),
        "a2": (256, n_actions),
    }
    params = {}
    keys = jax.random.split(key, 2 * len(sizes))
    for idx, (name, (fan_in, fan_out)) in enumerate(sizes.items()):
        kw, kb = keys[2 * idx], keys[2 * idx + 1]
        scale = 1.0 / jnp.sqrt(jnp.float32(fan_in))
        params[f"w{name}"] = jax.random.uniform(
            kw, (fan_in, fan_out), jnp.float32, -scale, scale)
        params[f"b{name}"] = jax.random.uniform(
            kb, (1, fan_out), jnp.float32, -scale, scale)
    return params


def reference_forward(state, params):
    """Pure-JAX reference (un-fused, f32, highest matmul precision) for validation."""
    hi = jax.lax.Precision.HIGHEST
    h1 = jnp.maximum(jnp.dot(state, params["w1"], precision=hi) + params["b1"], 0.0)
    h2 = jnp.maximum(jnp.dot(h1, params["w2"], precision=hi) + params["b2"], 0.0)
    v = jnp.maximum(jnp.dot(h2, params["wv1"], precision=hi) + params["bv1"], 0.0)
    val = jnp.dot(v, params["wv2"], precision=hi) + params["bv2"]
    a = jnp.maximum(jnp.dot(h2, params["wa1"], precision=hi) + params["ba1"], 0.0)
    adv = jnp.dot(a, params["wa2"], precision=hi) + params["ba2"]
    return val + (adv - adv.mean(axis=1, keepdims=True))


if __name__ == "__main__":
    key = jax.random.PRNGKey(0)
    k_state, k_params, k_state2 = jax.random.split(key, 3)

    batch = 8
    input_dims = 64
    n_actions = 8

    state = jax.random.normal(k_state, (batch, input_dims), jnp.float32)
    params = init_params(k_params, input_dims, n_actions)
    q_ref = reference_forward(state, params)

    # f32-operand path (tight-ish check; tolerance covers MXU f32 pass policy).
    fused_f32 = fuse_params(params, n_actions, weights_dtype=jnp.float32)
    q = jax.block_until_ready(dueling_q_forward(state, fused_f32, n_actions))
    assert q.shape == (batch, n_actions)
    assert jnp.allclose(q, q_ref, atol=2e-2, rtol=2e-2), "f32 mismatch vs reference"

    # bf16-operand DEFAULT path (fast MXU rate on v5e/v6e/v7x), f32 accumulation.
    # Loose tolerance: Q-values are quantization-tolerant for RL inference.
    fused_bf16 = fuse_params(params, n_actions)
    q16 = jax.block_until_ready(dueling_q_forward(state, fused_bf16, n_actions))
    assert q16.shape == (batch, n_actions)
    assert jnp.allclose(q16, q_ref, atol=0.25, rtol=0.05), "bf16 mismatch vs reference"

    # Larger ragged batch: exercises padding, grid > 1 and the 2-way row split.
    batch2 = 600
    state2 = jax.random.normal(k_state2, (batch2, input_dims), jnp.float32)
    q2_ref = reference_forward(state2, params)
    q2 = jax.block_until_ready(dueling_q_forward(state2, fused_f32, n_actions))
    assert q2.shape == (batch2, n_actions)
    assert jnp.allclose(q2, q2_ref, atol=2e-2, rtol=2e-2), "large-batch mismatch vs reference"

    print("KERNEL_OK")
</pallas_src>

<mosaic_0001>
module attributes {stable_mosaic.version = 11 : i64} {
  func.func @dueling_q_kernel(%arg0: i32, %arg1: memref<8x64xf32, #tpu.memory_space<vmem>>, %arg2: memref<64x512xf32, #tpu.memory_space<vmem>>, %arg3: memref<1x512xf32, #tpu.memory_space<vmem>>, %arg4: memref<512x512xf32, #tpu.memory_space<vmem>>, %arg5: memref<1x512xf32, #tpu.memory_space<vmem>>, %arg6: memref<512x512xf32, #tpu.memory_space<vmem>>, %arg7: memref<1x512xf32, #tpu.memory_space<vmem>>, %arg8: memref<512x128xf32, #tpu.memory_space<vmem>>, %arg9: memref<1x128xf32, #tpu.memory_space<vmem>>, %arg10: memref<8x128xf32, #tpu.memory_space<vmem>>) attributes {dimension_semantics = [#tpu.dimension_semantics<parallel>], iteration_bounds = array<i64: 1>, scalar_prefetch = 0 : i64, scratch_operands = 0 : i64, tpu.core_type = #tpu.core_type<tc>, window_params = [{transform_indices = @transform_0, window_bounds = array<i64: 8, 64>}, {pipeline_mode = #tpu.pipeline_mode<synchronous>, transform_indices = @transform_1, window_bounds = array<i64: 64, 512>}, {pipeline_mode = #tpu.pipeline_mode<synchronous>, transform_indices = @transform_2, window_bounds = array<i64: 1, 512>}, {pipeline_mode = #tpu.pipeline_mode<synchronous>, transform_indices = @transform_3, window_bounds = array<i64: 512, 512>}, {pipeline_mode = #tpu.pipeline_mode<synchronous>, transform_indices = @transform_4, window_bounds = array<i64: 1, 512>}, {pipeline_mode = #tpu.pipeline_mode<synchronous>, transform_indices = @transform_5, window_bounds = array<i64: 512, 512>}, {pipeline_mode = #tpu.pipeline_mode<synchronous>, transform_indices = @transform_6, window_bounds = array<i64: 1, 512>}, {pipeline_mode = #tpu.pipeline_mode<synchronous>, transform_indices = @transform_7, window_bounds = array<i64: 512, 128>}, {pipeline_mode = #tpu.pipeline_mode<synchronous>, transform_indices = @transform_8, window_bounds = array<i64: 1, 128>}, {transform_indices = @transform_9, window_bounds = array<i64: 8, 128>}]} {
    %c0 = arith.constant 0 : index
    %c0_0 = arith.constant 0 : index
    %0 = vector.load %arg2[%c0, %c0_0] : memref<64x512xf32, #tpu.memory_space<vmem>>, vector<64x512xf32>
    %c0_1 = arith.constant 0 : index
    %c0_2 = arith.constant 0 : index
    %1 = vector.load %arg3[%c0_1, %c0_2] : memref<1x512xf32, #tpu.memory_space<vmem>>, vector<1x512xf32>
    %c0_3 = arith.constant 0 : index
    %c0_4 = arith.constant 0 : index
    %2 = vector.load %arg4[%c0_3, %c0_4] : memref<512x512xf32, #tpu.memory_space<vmem>>, vector<512x512xf32>
    %c0_5 = arith.constant 0 : index
    %c0_6 = arith.constant 0 : index
    %3 = vector.load %arg5[%c0_5, %c0_6] : memref<1x512xf32, #tpu.memory_space<vmem>>, vector<1x512xf32>
    %c0_7 = arith.constant 0 : index
    %c0_8 = arith.constant 0 : index
    %4 = vector.load %arg6[%c0_7, %c0_8] : memref<512x512xf32, #tpu.memory_space<vmem>>, vector<512x512xf32>
    %c0_9 = arith.constant 0 : index
    %c0_10 = arith.constant 0 : index
    %5 = vector.load %arg7[%c0_9, %c0_10] : memref<1x512xf32, #tpu.memory_space<vmem>>, vector<1x512xf32>
    %c0_11 = arith.constant 0 : index
    %c0_12 = arith.constant 0 : index
    %6 = vector.load %arg8[%c0_11, %c0_12] : memref<512x128xf32, #tpu.memory_space<vmem>>, vector<512x128xf32>
    %c0_13 = arith.constant 0 : index
    %c0_14 = arith.constant 0 : index
    %7 = vector.load %arg9[%c0_13, %c0_14] : memref<1x128xf32, #tpu.memory_space<vmem>>, vector<1x128xf32>
    %8 = tpu.iota {dimensions = array<i32: 1>} : vector<8x128xi32>
    %c8_i32 = arith.constant 8 : i32
    %9 = vector.broadcast %c8_i32 : i32 to vector<8x128xi32>
    %10 = arith.cmpi slt, %8, %9 : vector<8x128xi32>
    %c0_15 = arith.constant 0 : index
    %c0_16 = arith.constant 0 : index
    %11 = vector.load %arg1[%c0_15, %c0_16] : memref<8x64xf32, #tpu.memory_space<vmem>>, vector<8x64xf32>
    %cst = arith.constant dense<0.000000e+00> : vector<8x512xf32>
    %12 = tpu.matmul %11, %0, %cst {dimension_numbers = #tpu.dot_dimension_numbers<[1], [0], [0], [1], [0, 0, 1, 1], [], []>} : vector<8x64xf32>, vector<64x512xf32>, vector<8x512xf32> -> vector<8x512xf32>
    %13 = vector.broadcast %1 : vector<1x512xf32> to vector<8x512xf32>
    %14 = arith.addf %12, %13 : vector<8x512xf32>
    %cst_17 = arith.constant 0.000000e+00 : f32
    %15 = vector.broadcast %cst_17 : f32 to vector<8x512xf32>
    %16 = arith.maximumf %14, %15 : vector<8x512xf32>
    %cst_18 = arith.constant dense<0.000000e+00> : vector<8x512xf32>
    %17 = tpu.matmul %16, %2, %cst_18 {dimension_numbers = #tpu.dot_dimension_numbers<[1], [0], [0], [1], [0, 0, 1, 1], [], []>} : vector<8x512xf32>, vector<512x512xf32>, vector<8x512xf32> -> vector<8x512xf32>
    %18 = vector.broadcast %3 : vector<1x512xf32> to vector<8x512xf32>
    %19 = arith.addf %17, %18 : vector<8x512xf32>
    %cst_19 = arith.constant 0.000000e+00 : f32
    %20 = vector.broadcast %cst_19 : f32 to vector<8x512xf32>
    %21 = arith.maximumf %19, %20 : vector<8x512xf32>
    %cst_20 = arith.constant dense<0.000000e+00> : vector<8x512xf32>
    %22 = tpu.matmul %21, %4, %cst_20 {dimension_numbers = #tpu.dot_dimension_numbers<[1], [0], [0], [1], [0, 0, 1, 1], [], []>} : vector<8x512xf32>, vector<512x512xf32>, vector<8x512xf32> -> vector<8x512xf32>
    %23 = vector.broadcast %5 : vector<1x512xf32> to vector<8x512xf32>
    %24 = arith.addf %22, %23 : vector<8x512xf32>
    %cst_21 = arith.constant 0.000000e+00 : f32
    %25 = vector.broadcast %cst_21 : f32 to vector<8x512xf32>
    %26 = arith.maximumf %24, %25 : vector<8x512xf32>
    %cst_22 = arith.constant dense<0.000000e+00> : vector<8x128xf32>
    %27 = tpu.matmul %26, %6, %cst_22 {dimension_numbers = #tpu.dot_dimension_numbers<[1], [0], [0], [1], [0, 0, 1, 1], [], []>} : vector<8x512xf32>, vector<512x128xf32>, vector<8x128xf32> -> vector<8x128xf32>
    %28 = vector.broadcast %7 : vector<1x128xf32> to vector<8x128xf32>
    %29 = arith.addf %27, %28 : vector<8x128xf32>
    %30 = vector.extract_strided_slice %29 {offsets = [0, 127], sizes = [8, 1], strides = [1, 1]} : vector<8x128xf32> to vector<8x1xf32>
    %cst_23 = arith.constant dense<0.000000e+00> : vector<8xf32>
    %31 = vector.multi_reduction <add>, %29, %cst_23 [1] : vector<8x128xf32> to vector<8xf32>
    %32 = vector.shape_cast %31 : vector<8xf32> to vector<8x1xf32>
    %33 = arith.subf %32, %30 : vector<8x1xf32>
    %cst_24 = arith.constant 1.250000e-01 : f32
    %34 = vector.broadcast %cst_24 : f32 to vector<8x1xf32>
    %35 = arith.mulf %33, %34 : vector<8x1xf32>
    %36 = arith.subf %30, %35 : vector<8x1xf32>
    %37 = vector.broadcast %36 : vector<8x1xf32> to vector<8x128xf32>
    %38 = arith.addf %29, %37 : vector<8x128xf32>
    %cst_25 = arith.constant 0.000000e+00 : f32
    %39 = vector.broadcast %cst_25 : f32 to vector<8x128xf32>
    %40 = arith.select %10, %38, %39 : vector<8x128xi1>, vector<8x128xf32>
    %c0_26 = arith.constant 0 : index
    %c0_27 = arith.constant 0 : index
    %41 = vector.load %arg10[%c0_26, %c0_27] : memref<8x128xf32, #tpu.memory_space<vmem>>, vector<8x128xf32>
    tpu.vector_store %arg10[%c0_26, %c0_27], %40 {strides = array<i32>} : memref<8x128xf32, #tpu.memory_space<vmem>>, vector<8x128xf32>,
    return
  }
  func.func @transform_0(%arg0: i32) -> (i32, i32) {
    %c0_i32 = arith.constant 0 : i32
    %c0_i32_0 = arith.constant 0 : i32
    return %arg0, %c0_i32 : i32, i32
  }
  func.func @transform_1(%arg0: i32) -> (i32, i32) {
    %c0_i32 = arith.constant 0 : i32
    %c0_i32_0 = arith.constant 0 : i32
    %c0_i32_1 = arith.constant 0 : i32
    return %c0_i32, %c0_i32_0 : i32, i32
  }
  func.func @transform_2(%arg0: i32) -> (i32, i32) {
    %c0_i32 = arith.constant 0 : i32
    %c0_i32_0 = arith.constant 0 : i32
    %c0_i32_1 = arith.constant 0 : i32
    return %c0_i32, %c0_i32_0 : i32, i32
  }
  func.func @transform_3(%arg0: i32) -> (i32, i32) {
    %c0_i32 = arith.constant 0 : i32
    %c0_i32_0 = arith.constant 0 : i32
    %c0_i32_1 = arith.constant 0 : i32
    return %c0_i32, %c0_i32_0 : i32, i32
  }
  func.func @transform_4(%arg0: i32) -> (i32, i32) {
    %c0_i32 = arith.constant 0 : i32
    %c0_i32_0 = arith.constant 0 : i32
    %c0_i32_1 = arith.constant 0 : i32
    return %c0_i32, %c0_i32_0 : i32, i32
  }
  func.func @transform_5(%arg0: i32) -> (i32, i32) {
    %c0_i32 = arith.constant 0 : i32
    %c0_i32_0 = arith.constant 0 : i32
    %c0_i32_1 = arith.constant 0 : i32
    return %c0_i32, %c0_i32_0 : i32, i32
  }
  func.func @transform_6(%arg0: i32) -> (i32, i32) {
    %c0_i32 = arith.constant 0 : i32
    %c0_i32_0 = arith.constant 0 : i32
    %c0_i32_1 = arith.constant 0 : i32
    return %c0_i32, %c0_i32_0 : i32, i32
  }
  func.func @transform_7(%arg0: i32) -> (i32, i32) {
    %c0_i32 = arith.constant 0 : i32
    %c0_i32_0 = arith.constant 0 : i32
    %c0_i32_1 = arith.constant 0 : i32
    return %c0_i32, %c0_i32_0 : i32, i32
  }
  func.func @transform_8(%arg0: i32) -> (i32, i32) {
    %c0_i32 = arith.constant 0 : i32
    %c0_i32_0 = arith.constant 0 : i32
    %c0_i32_1 = arith.constant 0 : i32
    return %c0_i32, %c0_i32_0 : i32, i32
  }
  func.func @transform_9(%arg0: i32) -> (i32, i32) {
    %c0_i32 = arith.constant 0 : i32
    %c0_i32_0 = arith.constant 0 : i32
    return %arg0, %c0_i32 : i32, i32
  }
}

</mosaic_0001>

<llo_original>
// kernel: tpu_custom_call.1
$region0: #{tpu_custom_call.1}
  #allocation0 [shape = 'u32[]', space=smem, size = 0x4, offset = 0x4, fixed_abs, tag = 'smem constant byte address 0x4 - core index']
  #allocation1 [shape = 'u32[144,128]{1,0:T(1,128)}', space=vmem, size = 0x12000, scoped, tag = 'internal scratch']
  %s0 = inlined_call_operand.hbm [shape: f32[8,64], index: 0, kind: input, shape index: {}]
  %s1 = inlined_call_operand.hbm [shape: f32[64,512], index: 1, kind: input, shape index: {}]
  %s2 = inlined_call_operand.hbm [shape: f32[1,512], index: 2, kind: input, shape index: {}]
  %s3 = inlined_call_operand.hbm [shape: f32[512,512], index: 3, kind: input, shape index: {}]
  %s4 = inlined_call_operand.vmem [shape: f32[1,512], index: 4, kind: input, shape index: {}]
  %s5 = inlined_call_operand.hbm [shape: f32[512,512], index: 5, kind: input, shape index: {}]
  %s6 = inlined_call_operand.vmem [shape: f32[1,512], index: 6, kind: input, shape index: {}]
  %s7 = inlined_call_operand.hbm [shape: f32[512,128], index: 7, kind: input, shape index: {}]
  %s8 = inlined_call_operand.vmem [shape: f32[1,128], index: 8, kind: input, shape index: {}]
  %s9 = inlined_call_operand.hbm [shape: f32[8,128], index: 9, kind: output, shape index: {}]
  %s10 = sld [smem:[#allocation0]]
  $region70: #{tpu_custom_call.1} parent=0
    _
  %s12 = ssub.s32 1, %s10
  %s13 = scalar_select 0, %s12, %s10
  $region1: #{tpu_custom_call.1} parent=0
    #allocation2 [shape = 'u8[4096]{0}', space=vmem, size = 0x1000, scoped, tag = 'input window, operand 0, single buffered']
    #allocation3 [shape = 's32[1]{0}', space=sflag, size = 0x4, scoped, tag = 'scoped memory for tpu_custom_call.1']
    #allocation4 [shape = 's32[1]{0}', space=sflag, size = 0x4, scoped, tag = 'scoped memory for tpu_custom_call.1']
    #allocation5 [shape = 'u8[131072]{0}', space=vmem, size = 0x20000, scoped, tag = 'input window, operand 1, single buffered']
    #allocation6 [shape = 's32[1]{0}', space=sflag, size = 0x4, scoped, tag = 'scoped memory for tpu_custom_call.1']
    #allocation7 [shape = 'u8[2048]{0}', space=vmem, size = 0x800, scoped, tag = 'input window, operand 2, single buffered']
    #allocation8 [shape = 'u8[1048576]{0}', space=vmem, size = 0x100000, scoped, tag = 'input window, operand 3, single buffered']
    #allocation9 [shape = 's32[1]{0}', space=sflag, size = 0x4, scoped, tag = 'scoped memory for tpu_custom_call.1']
    #allocation10 [shape = 'u8[1048576]{0}', space=vmem, size = 0x100000, scoped, tag = 'input window, operand 5, single buffered']
    #allocation11 [shape = 'u8[262144]{0}', space=vmem, size = 0x40000, scoped, tag = 'input window, operand 7, single buffered']
    #allocation12 [shape = 's32[1]{0}', space=sflag, size = 0x4, scoped, tag = 'scoped memory for tpu_custom_call.1']
    #allocation13 [shape = 'u8[4096]{0}', space=vmem, size = 0x1000, scoped, tag = 'output window, operand 0, single buffered']
    %14 = vsyncpa [#allocation3], 0
    %15 = vsyncpa [#allocation6], 0
    %16 = vsyncpa [#allocation9], 0
    %17 = vsyncpa [#allocation12], 0
    %18 = vsyncpa [#allocation4], 0
    // Predicated region
    $region2: #{tpu_custom_call.1} parent=1 // pred_check
      _
    $region3: #{tpu_custom_call.1} parent=1 // pred_check_branch
      %20 = sbr.rel (0) target = $region5
    $region4: #{tpu_custom_call.1} parent=1 // pred_region
      %s22 = ssub.s32 128, 128
      %23 = vsyncadd [#allocation3], %s22
      %s25 = sshll.u32 [#allocation2], 4
      %s26 = int_to_ptr.vmem [resolvable:$true] %s25
      %28 = dma.hbm_to_vmem [thread:$0]  %s0, 128, %s26, [#allocation3]
    $region5: #{tpu_custom_call.1} parent=1 // pred_fallthru
      _
    // Predicated region
    $region6: #{tpu_custom_call.1} parent=1 // pred_check
      _
    $region7: #{tpu_custom_call.1} parent=1 // pred_check_branch
      %30 = sbr.rel (0) target = $region9
    $region8: #{tpu_custom_call.1} parent=1 // pred_region
      %s32 = ssub.s32 4096, 4096
      %33 = vsyncadd [#allocation6], %s32
      %s34 = sshll.u32 [#allocation5], 4
      %s35 = int_to_ptr.vmem [resolvable:$true] %s34
      %40 = dma.hbm_to_vmem [thread:$0]  %s1, 4096, %s35, [#allocation6], 512, 512, 32
    $region9: #{tpu_custom_call.1} parent=1 // pred_fallthru
      _
    // Predicated region
    $region10: #{tpu_custom_call.1} parent=1 // pred_check
      _
    $region11: #{tpu_custom_call.1} parent=1 // pred_check_branch
      %42 = sbr.rel (0) target = $region13
    $region12: #{tpu_custom_call.1} parent=1 // pred_region
      %s44 = ssub.s32 64, 64
      %45 = vsyncadd [#allocation6], %s44
      %s47 = sshll.u32 [#allocation7], 4
      %s48 = int_to_ptr.vmem [resolvable:$true] %s47
      %50 = dma.hbm_to_vmem [thread:$0]  %s2, 64, %s48, [#allocation6]
    $region13: #{tpu_custom_call.1} parent=1 // pred_fallthru
      _
    // Predicated region
    $region14: #{tpu_custom_call.1} parent=1 // pred_check
      _
    $region15: #{tpu_custom_call.1} parent=1 // pred_check_branch
      %52 = sbr.rel (0) target = $region17
    $region16: #{tpu_custom_call.1} parent=1 // pred_region
      %s54 = ssub.s32 32768, 32768
      %55 = vsyncadd [#allocation9], %s54
      %s56 = sshll.u32 [#allocation8], 4
      %s57 = int_to_ptr.vmem [resolvable:$true] %s56
      %62 = dma.hbm_to_vmem [thread:$0]  %s3, 32768, %s57, [#allocation9], 512, 512, 32
    $region17: #{tpu_custom_call.1} parent=1 // pred_fallthru
      _
    // Predicated region
    $region18: #{tpu_custom_call.1} parent=1 // pred_check
      _
    $region19: #{tpu_custom_call.1} parent=1 // pred_check_branch
      %64 = sbr.rel (0) target = $region21
    $region20: #{tpu_custom_call.1} parent=1 // pred_region
      _
    $region21: #{tpu_custom_call.1} parent=1 // pred_fallthru
      _
    // Predicated region
    $region22: #{tpu_custom_call.1} parent=1 // pred_check
      _
    $region23: #{tpu_custom_call.1} parent=1 // pred_check_branch
      %66 = sbr.rel (0) target = $region25
    $region24: #{tpu_custom_call.1} parent=1 // pred_region
      %s68 = ssub.s32 32768, 32768
      %69 = vsyncadd [#allocation9], %s68
      %s70 = sshll.u32 [#allocation10], 4
      %s71 = int_to_ptr.vmem [resolvable:$true] %s70
      %76 = dma.hbm_to_vmem [thread:$0]  %s5, 32768, %s71, [#allocation9], 512, 512, 32
    $region25: #{tpu_custom_call.1} parent=1 // pred_fallthru
      _
    // Predicated region
    $region26: #{tpu_custom_call.1} parent=1 // pred_check
      _
    $region27: #{tpu_custom_call.1} parent=1 // pred_check_branch
      %78 = sbr.rel (0) target = $region29
    $region28: #{tpu_custom_call.1} parent=1 // pred_region
      _
    $region29: #{tpu_custom_call.1} parent=1 // pred_fallthru
      _
    // Predicated region
    $region30: #{tpu_custom_call.1} parent=1 // pred_check
      _
    $region31: #{tpu_custom_call.1} parent=1 // pred_check_branch
      %80 = sbr.rel (0) target = $region33
    $region32: #{tpu_custom_call.1} parent=1 // pred_region
      %s82 = ssub.s32 8192, 8192
      %83 = vsyncadd [#allocation12], %s82
      %s84 = sshll.u32 [#allocation11], 4
      %s85 = int_to_ptr.vmem [resolvable:$true] %s84
      %90 = dma.hbm_to_vmem [thread:$0]  %s7, 8192, %s85, [#allocation12], 128, 128, 8
    $region33: #{tpu_custom_call.1} parent=1 // pred_fallthru
      _
    // Predicated region
    $region34: #{tpu_custom_call.1} parent=1 // pred_check
      _
    $region35: #{tpu_custom_call.1} parent=1 // pred_check_branch
      %92 = sbr.rel (0) target = $region37
    $region36: #{tpu_custom_call.1} parent=1 // pred_region
      _
    $region37: #{tpu_custom_call.1} parent=1 // pred_fallthru
      _
    // Predicated region
    $region38: #{tpu_custom_call.1} parent=1 // pred_check
      _
    $region39: #{tpu_custom_call.1} parent=1 // pred_check_branch
      %94 = sbr.rel (0) target = $region41
    $region40: #{tpu_custom_call.1} parent=1 // pred_region
      %95 = dma.done [#allocation3], 128
    $region41: #{tpu_custom_call.1} parent=1 // pred_fallthru
      _
    // Predicated region
    $region42: #{tpu_custom_call.1} parent=1 // pred_check
      _
    $region43: #{tpu_custom_call.1} parent=1 // pred_check_branch
      %97 = sbr.rel (0) target = $region45
    $region44: #{tpu_custom_call.1} parent=1 // pred_region
      %98 = dma.done [#allocation6], 4096
    $region45: #{tpu_custom_call.1} parent=1 // pred_fallthru
      _
    // Predicated region
    $region46: #{tpu_custom_call.1} parent=1 // pred_check
      _
    $region47: #{tpu_custom_call.1} parent=1 // pred_check_branch
      %100 = sbr.rel (0) target = $region49
    $region48: #{tpu_custom_call.1} parent=1 // pred_region
      %101 = dma.done [#allocation6], 64
    $region49: #{tpu_custom_call.1} parent=1 // pred_fallthru
      _
    // Predicated region
    $region50: #{tpu_custom_call.1} parent=1 // pred_check
      _
    $region51: #{tpu_custom_call.1} parent=1 // pred_check_branch
      %103 = sbr.rel (0) target = $region53
    $region52: #{tpu_custom_call.1} parent=1 // pred_region
      %104 = dma.done [#allocation9], 32768
    $region53: #{tpu_custom_call.1} parent=1 // pred_fallthru
      _
    // Predicated region
    $region54: #{tpu_custom_call.1} parent=1 // pred_check
      _
    $region55: #{tpu_custom_call.1} parent=1 // pred_check_branch
      %106 = sbr.rel (0) target = $region57
    $region56: #{tpu_custom_call.1} parent=1 // pred_region
      %107 = dma.done [#allocation9], 32768
    $region57: #{tpu_custom_call.1} parent=1 // pred_fallthru
      _
    // Predicated region
    $region58: #{tpu_custom_call.1} parent=1 // pred_check
      _
    $region59: #{tpu_custom_call.1} parent=1 // pred_check_branch
      %109 = sbr.rel (0) target = $region61
    $region60: #{tpu_custom_call.1} parent=1 // pred_region
      %110 = dma.done [#allocation12], 8192
    $region61: #{tpu_custom_call.1} parent=1 // pred_fallthru
      _
    %v111 = vld [vmem:[#allocation5] sm:$0xff]
    %v112 = vld [vmem:[#allocation5 + $0x8] sm:$0xff]
    %v113 = vld [vmem:[#allocation5 + $0x10] sm:$0xff]
    %v114 = vld [vmem:[#allocation5 + $0x18] sm:$0xff]
    %v115 = vld [vmem:[#allocation5 + $0x20] sm:$0xff]
    %v116 = vld [vmem:[#allocation5 + $0x28] sm:$0xff]
    %v117 = vld [vmem:[#allocation5 + $0x30] sm:$0xff]
    %v118 = vld [vmem:[#allocation5 + $0x38] sm:$0xff]
    %v119 = vld [vmem:[#allocation5 + $0x40] sm:$0xff]
    %v120 = vld [vmem:[#allocation5 + $0x48] sm:$0xff]
    %v121 = vld [vmem:[#allocation5 + $0x50] sm:$0xff]
    %v122 = vld [vmem:[#allocation5 + $0x58] sm:$0xff]
    %v123 = vld [vmem:[#allocation5 + $0x60] sm:$0xff]
    %v124 = vld [vmem:[#allocation5 + $0x68] sm:$0xff]
    %v125 = vld [vmem:[#allocation5 + $0x70] sm:$0xff]
    %v126 = vld [vmem:[#allocation5 + $0x78] sm:$0xff]
    %v127 = vld [vmem:[#allocation5 + $0x80] sm:$0xff]
    %v128 = vld [vmem:[#allocation5 + $0x88] sm:$0xff]
    %v129 = vld [vmem:[#allocation5 + $0x90] sm:$0xff]
    %v130 = vld [vmem:[#allocation5 + $0x98] sm:$0xff]
    %v131 = vld [vmem:[#allocation5 + $0xa0] sm:$0xff]
    %v132 = vld [vmem:[#allocation5 + $0xa8] sm:$0xff]
    %v133 = vld [vmem:[#allocation5 + $0xb0] sm:$0xff]
    %v134 = vld [vmem:[#allocation5 + $0xb8] sm:$0xff]
    %v135 = vld [vmem:[#allocation5 + $0xc0] sm:$0xff]
    %v136 = vld [vmem:[#allocation5 + $0xc8] sm:$0xff]
    %v137 = vld [vmem:[#allocation5 + $0xd0] sm:$0xff]
    %v138 = vld [vmem:[#allocation5 + $0xd8] sm:$0xff]
    %v139 = vld [vmem:[#allocation5 + $0xe0] sm:$0xff]
    %v140 = vld [vmem:[#allocation5 + $0xe8] sm:$0xff]
    %v141 = vld [vmem:[#allocation5 + $0xf0] sm:$0xff]
    %v142 = vld [vmem:[#allocation5 + $0xf8] sm:$0xff]
    %v143 = vld [vmem:[#allocation7] sm:$0xf]
    %v144 = vld [vmem:[#allocation8] sm:$0xff]
    %v145 = vld [vmem:[#allocation8 + $0x8] sm:$0xff]
    %v146 = vld [vmem:[#allocation8 + $0x10] sm:$0xff]
    %v147 = vld [vmem:[#allocation8 + $0x18] sm:$0xff]
    %v148 = vld [vmem:[#allocation8 + $0x20] sm:$0xff]
    %v149 = vld [vmem:[#allocation8 + $0x28] sm:$0xff]
    %v150 = vld [vmem:[#allocation8 + $0x30] sm:$0xff]
    %v151 = vld [vmem:[#allocation8 + $0x38] sm:$0xff]
    %v152 = vld [vmem:[#allocation8 + $0x40] sm:$0xff]
    %v153 = vld [vmem:[#allocation8 + $0x48] sm:$0xff]
    %v154 = vld [vmem:[#allocation8 + $0x50] sm:$0xff]
    %v155 = vld [vmem:[#allocation8 + $0x58] sm:$0xff]
    %v156 = vld [vmem:[#allocation8 + $0x60] sm:$0xff]
    %v157 = vld [vmem:[#allocation8 + $0x68] sm:$0xff]
    %v158 = vld [vmem:[#allocation8 + $0x70] sm:$0xff]
    %v159 = vld [vmem:[#allocation8 + $0x78] sm:$0xff]
    %v160 = vld [vmem:[#allocation8 + $0x80] sm:$0xff]
    %v161 = vld [vmem:[#allocation8 + $0x88] sm:$0xff]
    %v162 = vld [vmem:[#allocation8 + $0x90] sm:$0xff]
    %v163 = vld [vmem:[#allocation8 + $0x98] sm:$0xff]
    %v164 = vld [vmem:[#allocation8 + $0xa0] sm:$0xff]
    %v165 = vld [vmem:[#allocation8 + $0xa8] sm:$0xff]
    %v166 = vld [vmem:[#allocation8 + $0xb0] sm:$0xff]
    %v167 = vld [vmem:[#allocation8 + $0xb8] sm:$0xff]
    %v168 = vld [vmem:[#allocation8 + $0xc0] sm:$0xff]
    %v169 = vld [vmem:[#allocation8 + $0xc8] sm:$0xff]
    %v170 = vld [vmem:[#allocation8 + $0xd0] sm:$0xff]
    %v171 = vld [vmem:[#allocation8 + $0xd8] sm:$0xff]
    %v172 = vld [vmem:[#allocation8 + $0xe0] sm:$0xff]
    %v173 = vld [vmem:[#allocation8 + $0xe8] sm:$0xff]
    %v174 = vld [vmem:[#allocation8 + $0xf0] sm:$0xff]
    %v175 = vld [vmem:[#allocation8 + $0xf8] sm:$0xff]
    %v176 = vld [vmem:[#allocation8 + $0x100] sm:$0xff]
    %v177 = vld [vmem:[#allocation8 + $0x108] sm:$0xff]
    %v178 = vld [vmem:[#allocation8 + $0x110] sm:$0xff]
    %v179 = vld [vmem:[#allocation8 + $0x118] sm:$0xff]
    %v180 = vld [vmem:[#allocation8 + $0x120] sm:$0xff]
    %v181 = vld [vmem:[#allocation8 + $0x128] sm:$0xff]
    %v182 = vld [vmem:[#allocation8 + $0x130] sm:$0xff]
    %v183 = vld [vmem:[#allocation8 + $0x138] sm:$0xff]
    %v184 = vld [vmem:[#allocation8 + $0x140] sm:$0xff]
    %v185 = vld [vmem:[#allocation8 + $0x148] sm:$0xff]
    %v186 = vld [vmem:[#allocation8 + $0x150] sm:$0xff]
    %v187 = vld [vmem:[#allocation8 + $0x158] sm:$0xff]
    %v188 = vld [vmem:[#allocation8 + $0x160] sm:$0xff]
    %v189 = vld [vmem:[#allocation8 + $0x168] sm:$0xff]
    %v190 = vld [vmem:[#allocation8 + $0x170] sm:$0xff]
    %v191 = vld [vmem:[#allocation8 + $0x178] sm:$0xff]
    %v192 = vld [vmem:[#allocation8 + $0x180] sm:$0xff]
    %v193 = vld [vmem:[#allocation8 + $0x188] sm:$0xff]
    %v194 = vld [vmem:[#allocation8 + $0x190] sm:$0xff]
    %v195 = vld [vmem:[#allocation8 + $0x198] sm:$0xff]
    %v196 = vld [vmem:[#allocation8 + $0x1a0] sm:$0xff]
    %v197 = vld [vmem:[#allocation8 + $0x1a8] sm:$0xff]
    %v198 = vld [vmem:[#allocation8 + $0x1b0] sm:$0xff]
    %v199 = vld [vmem:[#allocation8 + $0x1b8] sm:$0xff]
    %v200 = vld [vmem:[#allocation8 + $0x1c0] sm:$0xff]
    %v201 = vld [vmem:[#allocation8 + $0x1c8] sm:$0xff]
    %v202 = vld [vmem:[#allocation8 + $0x1d0] sm:$0xff]
    %v203 = vld [vmem:[#allocation8 + $0x1d8] sm:$0xff]
    %v204 = vld [vmem:[#allocation8 + $0x1e0] sm:$0xff]
    %v205 = vld [vmem:[#allocation8 + $0x1e8] sm:$0xff]
    %v206 = vld [vmem:[#allocation8 + $0x1f0] sm:$0xff]
    %v207 = vld [vmem:[#allocation8 + $0x1f8] sm:$0xff]
    %v208 = vld [vmem:[#allocation8 + $0x200] sm:$0xff]
    %v209 = vld [vmem:[#allocation8 + $0x208] sm:$0xff]
    %v210 = vld [vmem:[#allocation8 + $0x210] sm:$0xff]
    %v211 = vld [vmem:[#allocation8 + $0x218] sm:$0xff]
    %v212 = vld [vmem:[#allocation8 + $0x220] sm:$0xff]
    %v213 = vld [vmem:[#allocation8 + $0x228] sm:$0xff]
    %v214 = vld [vmem:[#allocation8 + $0x230] sm:$0xff]
    %v215 = vld [vmem:[#allocation8 + $0x238] sm:$0xff]
    %v216 = vld [vmem:[#allocation8 + $0x240] sm:$0xff]
    %v217 = vld [vmem:[#allocation8 + $0x248] sm:$0xff]
    %v218 = vld [vmem:[#allocation8 + $0x250] sm:$0xff]
    %v219 = vld [vmem:[#allocation8 + $0x258] sm:$0xff]
    %v220 = vld [vmem:[#allocation8 + $0x260] sm:$0xff]
    %v221 = vld [vmem:[#allocation8 + $0x268] sm:$0xff]
    %v222 = vld [vmem:[#allocation8 + $0x270] sm:$0xff]
    %v223 = vld [vmem:[#allocation8 + $0x278] sm:$0xff]
    %v224 = vld [vmem:[#allocation8 + $0x280] sm:$0xff]
    %v225 = vld [vmem:[#allocation8 + $0x288] sm:$0xff]
    %v226 = vld [vmem:[#allocation8 + $0x290] sm:$0xff]
    %v227 = vld [vmem:[#allocation8 + $0x298] sm:$0xff]
    %v228 = vld [vmem:[#allocation8 + $0x2a0] sm:$0xff]
    %v229 = vld [vmem:[#allocation8 + $0x2a8] sm:$0xff]
    %v230 = vld [vmem:[#allocation8 + $0x2b0] sm:$0xff]
    %v231 = vld [vmem:[#allocation8 + $0x2b8] sm:$0xff]
    %v232 = vld [vmem:[#allocation8 + $0x2c0] sm:$0xff]
    %v233 = vld [vmem:[#allocation8 + $0x2c8] sm:$0xff]
    %v234 = vld [vmem:[#allocation8 + $0x2d0] sm:$0xff]
    %v235 = vld [vmem:[#allocation8 + $0x2d8] sm:$0xff]
    %v236 = vld [vmem:[#allocation8 + $0x2e0] sm:$0xff]
    %v237 = vld [vmem:[#allocation8 + $0x2e8] sm:$0xff]
    %v238 = vld [vmem:[#allocation8 + $0x2f0] sm:$0xff]
    %v239 = vld [vmem:[#allocation8 + $0x2f8] sm:$0xff]
    %v240 = vld [vmem:[#allocation8 + $0x300] sm:$0xff]
    %v241 = vld [vmem:[#allocation8 + $0x308] sm:$0xff]
    %v242 = vld [vmem:[#allocation8 + $0x310] sm:$0xff]
    %v243 = vld [vmem:[#allocation8 + $0x318] sm:$0xff]
    %v244 = vld [vmem:[#allocation8 + $0x320] sm:$0xff]
    %v245 = vld [vmem:[#allocation8 + $0x328] sm:$0xff]
    %v246 = vld [vmem:[#allocation8 + $0x330] sm:$0xff]
    %v247 = vld [vmem:[#allocation8 + $0x338] sm:$0xff]
    %v248 = vld [vmem:[#allocation8 + $0x340] sm:$0xff]
    %v249 = vld [vmem:[#allocation8 + $0x348] sm:$0xff]
    %v250 = vld [vmem:[#allocation8 + $0x350] sm:$0xff]
    %v251 = vld [vmem:[#allocation8 + $0x358] sm:$0xff]
    %v252 = vld [vmem:[#allocation8 + $0x360] sm:$0xff]
    %v253 = vld [vmem:[#allocation8 + $0x368] sm:$0xff]
    %v254 = vld [vmem:[#allocation8 + $0x370] sm:$0xff]
    %v255 = vld [vmem:[#allocation8 + $0x378] sm:$0xff]
    %v256 = vld [vmem:[#allocation8 + $0x380] sm:$0xff]
    %v257 = vld [vmem:[#allocation8 + $0x388] sm:$0xff]
    %v258 = vld [vmem:[#allocation8 + $0x390] sm:$0xff]
    %v259 = vld [vmem:[#allocation8 + $0x398] sm:$0xff]
    %v260 = vld [vmem:[#allocation8 + $0x3a0] sm:$0xff]
    %v261 = vld [vmem:[#allocation8 + $0x3a8] sm:$0xff]
    %v262 = vld [vmem:[#allocation8 + $0x3b0] sm:$0xff]
    %v263 = vld [vmem:[#allocation8 + $0x3b8] sm:$0xff]
    %v264 = vld [vmem:[#allocation8 + $0x3c0] sm:$0xff]
    %v265 = vld [vmem:[#allocation8 + $0x3c8] sm:$0xff]
    %v266 = vld [vmem:[#allocation8 + $0x3d0] sm:$0xff]
    %v267 = vld [vmem:[#allocation8 + $0x3d8] sm:$0xff]
    %v268 = vld [vmem:[#allocation8 + $0x3e0] sm:$0xff]
    %v269 = vld [vmem:[#allocation8 + $0x3e8] sm:$0xff]
    %v270 = vld [vmem:[#allocation8 + $0x3f0] sm:$0xff]
    %v271 = vld [vmem:[#allocation8 + $0x3f8] sm:$0xff]
    %v272 = vld [vmem:[#allocation8 + $0x400] sm:$0xff]
    %v273 = vld [vmem:[#allocation8 + $0x408] sm:$0xff]
    %v274 = vld [vmem:[#allocation8 + $0x410] sm:$0xff]
    %v275 = vld [vmem:[#allocation8 + $0x418] sm:$0xff]
    %v276 = vld [vmem:[#allocation8 + $0x420] sm:$0xff]
    %v277 = vld [vmem:[#allocation8 + $0x428] sm:$0xff]
    %v278 = vld [vmem:[#allocation8 + $0x430] sm:$0xff]
    %v279 = vld [vmem:[#allocation8 + $0x438] sm:$0xff]
    %v280 = vld [vmem:[#allocation8 + $0x440] sm:$0xff]
    %v281 = vld [vmem:[#allocation8 + $0x448] sm:$0xff]
    %v282 = vld [vmem:[#allocation8 + $0x450] sm:$0xff]
    %v283 = vld [vmem:[#allocation8 + $0x458] sm:$0xff]
    %v284 = vld [vmem:[#allocation8 + $0x460] sm:$0xff]
    %v285 = vld [vmem:[#allocation8 + $0x468] sm:$0xff]
    %v286 = vld [vmem:[#allocation8 + $0x470] sm:$0xff]
    %v287 = vld [vmem:[#allocation8 + $0x478] sm:$0xff]
    %v288 = vld [vmem:[#allocation8 + $0x480] sm:$0xff]
    %v289 = vld [vmem:[#allocation8 + $0x488] sm:$0xff]
    %v290 = vld [vmem:[#allocation8 + $0x490] sm:$0xff]
    %v291 = vld [vmem:[#allocation8 + $0x498] sm:$0xff]
    %v292 = vld [vmem:[#allocation8 + $0x4a0] sm:$0xff]
    %v293 = vld [vmem:[#allocation8 + $0x4a8] sm:$0xff]
    %v294 = vld [vmem:[#allocation8 + $0x4b0] sm:$0xff]
    %v295 = vld [vmem:[#allocation8 + $0x4b8] sm:$0xff]
    %v296 = vld [vmem:[#allocation8 + $0x4c0] sm:$0xff]
    %v297 = vld [vmem:[#allocation8 + $0x4c8] sm:$0xff]
    %v298 = vld [vmem:[#allocation8 + $0x4d0] sm:$0xff]
    %v299 = vld [vmem:[#allocation8 + $0x4d8] sm:$0xff]
    %v300 = vld [vmem:[#allocation8 + $0x4e0] sm:$0xff]
    %v301 = vld [vmem:[#allocation8 + $0x4e8] sm:$0xff]
    %v302 = vld [vmem:[#allocation8 + $0x4f0] sm:$0xff]
    %v303 = vld [vmem:[#allocation8 + $0x4f8] sm:$0xff]
    %v304 = vld [vmem:[#allocation8 + $0x500] sm:$0xff]
    %v305 = vld [vmem:[#allocation8 + $0x508] sm:$0xff]
    %v306 = vld [vmem:[#allocation8 + $0x510] sm:$0xff]
    %v307 = vld [vmem:[#allocation8 + $0x518] sm:$0xff]
    %v308 = vld [vmem:[#allocation8 + $0x520] sm:$0xff]
    %v309 = vld [vmem:[#allocation8 + $0x528] sm:$0xff]
    %v310 = vld [vmem:[#allocation8 + $0x530] sm:$0xff]
    %v311 = vld [vmem:[#allocation8 + $0x538] sm:$0xff]
    %v312 = vld [vmem:[#allocation8 + $0x540] sm:$0xff]
    %v313 = vld [vmem:[#allocation8 + $0x548] sm:$0xff]
    %v314 = vld [vmem:[#allocation8 + $0x550] sm:$0xff]
    %v315 = vld [vmem:[#allocation8 + $0x558] sm:$0xff]
    %v316 = vld [vmem:[#allocation8 + $0x560] sm:$0xff]
    %v317 = vld [vmem:[#allocation8 + $0x568] sm:$0xff]
    %v318 = vld [vmem:[#allocation8 + $0x570] sm:$0xff]
    %v319 = vld [vmem:[#allocation8 + $0x578] sm:$0xff]
    %v320 = vld [vmem:[#allocation8 + $0x580] sm:$0xff]
    %v321 = vld [vmem:[#allocation8 + $0x588] sm:$0xff]
    %v322 = vld [vmem:[#allocation8 + $0x590] sm:$0xff]
    %v323 = vld [vmem:[#allocation8 + $0x598] sm:$0xff]
    %v324 = vld [vmem:[#allocation8 + $0x5a0] sm:$0xff]
    %v325 = vld [vmem:[#allocation8 + $0x5a8] sm:$0xff]
    %v326 = vld [vmem:[#allocation8 + $0x5b0] sm:$0xff]
    %v327 = vld [vmem:[#allocation8 + $0x5b8] sm:$0xff]
    %v328 = vld [vmem:[#allocation8 + $0x5c0] sm:$0xff]
    %v329 = vld [vmem:[#allocation8 + $0x5c8] sm:$0xff]
    %v330 = vld [vmem:[#allocation8 + $0x5d0] sm:$0xff]
    %v331 = vld [vmem:[#allocation8 + $0x5d8] sm:$0xff]
    %v332 = vld [vmem:[#allocation8 + $0x5e0] sm:$0xff]
    %v333 = vld [vmem:[#allocation8 + $0x5e8] sm:$0xff]
    %v334 = vld [vmem:[#allocation8 + $0x5f0] sm:$0xff]
    %v335 = vld [vmem:[#allocation8 + $0x5f8] sm:$0xff]
    %v336 = vld [vmem:[#allocation8 + $0x600] sm:$0xff]
    %v337 = vld [vmem:[#allocation8 + $0x608] sm:$0xff]
    %v338 = vld [vmem:[#allocation8 + $0x610] sm:$0xff]
    %v339 = vld [vmem:[#allocation8 + $0x618] sm:$0xff]
    %v340 = vld [vmem:[#allocation8 + $0x620] sm:$0xff]
    %v341 = vld [vmem:[#allocation8 + $0x628] sm:$0xff]
    %v342 = vld [vmem:[#allocation8 + $0x630] sm:$0xff]
    %v343 = vld [vmem:[#allocation8 + $0x638] sm:$0xff]
    %v344 = vld [vmem:[#allocation8 + $0x640] sm:$0xff]
    %v345 = vld [vmem:[#allocation8 + $0x648] sm:$0xff]
    %v346 = vld [vmem:[#allocation8 + $0x650] sm:$0xff]
    %v347 = vld [vmem:[#allocation8 + $0x658] sm:$0xff]
    %v348 = vld [vmem:[#allocation8 + $0x660] sm:$0xff]
    %v349 = vld [vmem:[#allocation8 + $0x668] sm:$0xff]
    %v350 = vld [vmem:[#allocation8 + $0x670] sm:$0xff]
    %v351 = vld [vmem:[#allocation8 + $0x678] sm:$0xff]
    %v352 = vld [vmem:[#allocation8 + $0x680] sm:$0xff]
    %v353 = vld [vmem:[#allocation8 + $0x688] sm:$0xff]
    %v354 = vld [vmem:[#allocation8 + $0x690] sm:$0xff]
    %v355 = vld [vmem:[#allocation8 + $0x698] sm:$0xff]
    %v356 = vld [vmem:[#allocation8 + $0x6a0] sm:$0xff]
    %v357 = vld [vmem:[#allocation8 + $0x6a8] sm:$0xff]
    %v358 = vld [vmem:[#allocation8 + $0x6b0] sm:$0xff]
    %v359 = vld [vmem:[#allocation8 + $0x6b8] sm:$0xff]
    %v360 = vld [vmem:[#allocation8 + $0x6c0] sm:$0xff]
    %v361 = vld [vmem:[#allocation8 + $0x6c8] sm:$0xff]
    %v362 = vld [vmem:[#allocation8 + $0x6d0] sm:$0xff]
    %v363 = vld [vmem:[#allocation8 + $0x6d8] sm:$0xff]
    %v364 = vld [vmem:[#allocation8 + $0x6e0] sm:$0xff]
    %v365 = vld [vmem:[#allocation8 + $0x6e8] sm:$0xff]
    %v366 = vld [vmem:[#allocation8 + $0x6f0] sm:$0xff]
    %v367 = vld [vmem:[#allocation8 + $0x6f8] sm:$0xff]
    %v368 = vld [vmem:[#allocation8 + $0x700] sm:$0xff]
    %v369 = vld [vmem:[#allocation8 + $0x708] sm:$0xff]
    %v370 = vld [vmem:[#allocation8 + $0x710] sm:$0xff]
    %v371 = vld [vmem:[#allocation8 + $0x718] sm:$0xff]
    %v372 = vld [vmem:[#allocation8 + $0x720] sm:$0xff]
    %v373 = vld [vmem:[#allocation8 + $0x728] sm:$0xff]
    %v374 = vld [vmem:[#allocation8 + $0x730] sm:$0xff]
    %v375 = vld [vmem:[#allocation8 + $0x738] sm:$0xff]
    %v376 = vld [vmem:[#allocation8 + $0x740] sm:$0xff]
    %v377 = vld [vmem:[#allocation8 + $0x748] sm:$0xff]
    %v378 = vld [vmem:[#allocation8 + $0x750] sm:$0xff]
    %v379 = vld [vmem:[#allocation8 + $0x758] sm:$0xff]
    %v380 = vld [vmem:[#allocation8 + $0x760] sm:$0xff]
    %v381 = vld [vmem:[#allocation8 + $0x768] sm:$0xff]
    %v382 = vld [vmem:[#allocation8 + $0x770] sm:$0xff]
    %v383 = vld [vmem:[#allocation8 + $0x778] sm:$0xff]
    %v384 = vld [vmem:[#allocation8 + $0x780] sm:$0xff]
    %v385 = vld [vmem:[#allocation8 + $0x788] sm:$0xff]
    %v386 = vld [vmem:[#allocation8 + $0x790] sm:$0xff]
    %v387 = vld [vmem:[#allocation8 + $0x798] sm:$0xff]
    %v388 = vld [vmem:[#allocation8 + $0x7a0] sm:$0xff]
    %v389 = vld [vmem:[#allocation8 + $0x7a8] sm:$0xff]
    %v390 = vld [vmem:[#allocation8 + $0x7b0] sm:$0xff]
    %v391 = vld [vmem:[#allocation8 + $0x7b8] sm:$0xff]
    %v392 = vld [vmem:[#allocation8 + $0x7c0] sm:$0xff]
    %v393 = vld [vmem:[#allocation8 + $0x7c8] sm:$0xff]
    %v394 = vld [vmem:[#allocation8 + $0x7d0] sm:$0xff]
    %v395 = vld [vmem:[#allocation8 + $0x7d8] sm:$0xff]
    %v396 = vld [vmem:[#allocation8 + $0x7e0] sm:$0xff]
    %v397 = vld [vmem:[#allocation8 + $0x7e8] sm:$0xff]
    %v398 = vld [vmem:[#allocation8 + $0x7f0] sm:$0xff]
    %v399 = vld [vmem:[#allocation8 + $0x7f8] sm:$0xff]
    %v400 = vld [vmem:[%s4] sm:$0xf]
    %v401 = vld [vmem:[#allocation10] sm:$0xff]
    %v402 = vld [vmem:[#allocation10 + $0x8] sm:$0xff]
    %v403 = vld [vmem:[#allocation10 + $0x10] sm:$0xff]
    %v404 = vld [vmem:[#allocation10 + $0x18] sm:$0xff]
    %v405 = vld [vmem:[#allocation10 + $0x20] sm:$0xff]
    %v406 = vld [vmem:[#allocation10 + $0x28] sm:$0xff]
    %v407 = vld [vmem:[#allocation10 + $0x30] sm:$0xff]
    %v408 = vld [vmem:[#allocation10 + $0x38] sm:$0xff]
    %v409 = vld [vmem:[#allocation10 + $0x40] sm:$0xff]
    %v410 = vld [vmem:[#allocation10 + $0x48] sm:$0xff]
    %v411 = vld [vmem:[#allocation10 + $0x50] sm:$0xff]
    %v412 = vld [vmem:[#allocation10 + $0x58] sm:$0xff]
    %v413 = vld [vmem:[#allocation10 + $0x60] sm:$0xff]
    %v414 = vld [vmem:[#allocation10 + $0x68] sm:$0xff]
    %v415 = vld [vmem:[#allocation10 + $0x70] sm:$0xff]
    %v416 = vld [vmem:[#allocation10 + $0x78] sm:$0xff]
    %v417 = vld [vmem:[#allocation10 + $0x80] sm:$0xff]
    %v418 = vld [vmem:[#allocation10 + $0x88] sm:$0xff]
    %v419 = vld [vmem:[#allocation10 + $0x90] sm:$0xff]
    %v420 = vld [vmem:[#allocation10 + $0x98] sm:$0xff]
    %v421 = vld [vmem:[#allocation10 + $0xa0] sm:$0xff]
    %v422 = vld [vmem:[#allocation10 + $0xa8] sm:$0xff]
    %v423 = vld [vmem:[#allocation10 + $0xb0] sm:$0xff]
    %v424 = vld [vmem:[#allocation10 + $0xb8] sm:$0xff]
    %v425 = vld [vmem:[#allocation10 + $0xc0] sm:$0xff]
    %v426 = vld [vmem:[#allocation10 + $0xc8] sm:$0xff]
    %v427 = vld [vmem:[#allocation10 + $0xd0] sm:$0xff]
    %v428 = vld [vmem:[#allocation10 + $0xd8] sm:$0xff]
    %v429 = vld [vmem:[#allocation10 + $0xe0] sm:$0xff]
    %v430 = vld [vmem:[#allocation10 + $0xe8] sm:$0xff]
    %v431 = vld [vmem:[#allocation10 + $0xf0] sm:$0xff]
    %v432 = vld [vmem:[#allocation10 + $0xf8] sm:$0xff]
    %v433 = vld [vmem:[#allocation10 + $0x100] sm:$0xff]
    %v434 = vld [vmem:[#allocation10 + $0x108] sm:$0xff]
    %v435 = vld [vmem:[#allocation10 + $0x110] sm:$0xff]
    %v436 = vld [vmem:[#allocation10 + $0x118] sm:$0xff]
    %v437 = vld [vmem:[#allocation10 + $0x120] sm:$0xff]
    %v438 = vld [vmem:[#allocation10 + $0x128] sm:$0xff]
    %v439 = vld [vmem:[#allocation10 + $0x130] sm:$0xff]
    %v440 = vld [vmem:[#allocation10 + $0x138] sm:$0xff]
    %v441 = vld [vmem:[#allocation10 + $0x140] sm:$0xff]
    %v442 = vld [vmem:[#allocation10 + $0x148] sm:$0xff]
    %v443 = vld [vmem:[#allocation10 + $0x150] sm:$0xff]
    %v444 = vld [vmem:[#allocation10 + $0x158] sm:$0xff]
    %v445 = vld [vmem:[#allocation10 + $0x160] sm:$0xff]
    %v446 = vld [vmem:[#allocation10 + $0x168] sm:$0xff]
    %v447 = vld [vmem:[#allocation10 + $0x170] sm:$0xff]
    %v448 = vld [vmem:[#allocation10 + $0x178] sm:$0xff]
    %v449 = vld [vmem:[#allocation10 + $0x180] sm:$0xff]
    %v450 = vld [vmem:[#allocation10 + $0x188] sm:$0xff]
    %v451 = vld [vmem:[#allocation10 + $0x190] sm:$0xff]
    %v452 = vld [vmem:[#allocation10 + $0x198] sm:$0xff]
    %v453 = vld [vmem:[#allocation10 + $0x1a0] sm:$0xff]
    %v454 = vld [vmem:[#allocation10 + $0x1a8] sm:$0xff]
    %v455 = vld [vmem:[#allocation10 + $0x1b0] sm:$0xff]
    %v456 = vld [vmem:[#allocation10 + $0x1b8] sm:$0xff]
    %v457 = vld [vmem:[#allocation10 + $0x1c0] sm:$0xff]
    %v458 = vld [vmem:[#allocation10 + $0x1c8] sm:$0xff]
    %v459 = vld [vmem:[#allocation10 + $0x1d0] sm:$0xff]
    %v460 = vld [vmem:[#allocation10 + $0x1d8] sm:$0xff]
    %v461 = vld [vmem:[#allocation10 + $0x1e0] sm:$0xff]
    %v462 = vld [vmem:[#allocation10 + $0x1e8] sm:$0xff]
    %v463 = vld [vmem:[#allocation10 + $0x1f0] sm:$0xff]
    %v464 = vld [vmem:[#allocation10 + $0x1f8] sm:$0xff]
    %v465 = vld [vmem:[#allocation10 + $0x200] sm:$0xff]
    %v466 = vld [vmem:[#allocation10 + $0x208] sm:$0xff]
    %v467 = vld [vmem:[#allocation10 + $0x210] sm:$0xff]
    %v468 = vld [vmem:[#allocation10 + $0x218] sm:$0xff]
    %v469 = vld [vmem:[#allocation10 + $0x220] sm:$0xff]
    %v470 = vld [vmem:[#allocation10 + $0x228] sm:$0xff]
    %v471 = vld [vmem:[#allocation10 + $0x230] sm:$0xff]
    %v472 = vld [vmem:[#allocation10 + $0x238] sm:$0xff]
    %v473 = vld [vmem:[#allocation10 + $0x240] sm:$0xff]
    %v474 = vld [vmem:[#allocation10 + $0x248] sm:$0xff]
    %v475 = vld [vmem:[#allocation10 + $0x250] sm:$0xff]
    %v476 = vld [vmem:[#allocation10 + $0x258] sm:$0xff]
    %v477 = vld [vmem:[#allocation10 + $0x260] sm:$0xff]
    %v478 = vld [vmem:[#allocation10 + $0x268] sm:$0xff]
    %v479 = vld [vmem:[#allocation10 + $0x270] sm:$0xff]
    %v480 = vld [vmem:[#allocation10 + $0x278] sm:$0xff]
    %v481 = vld [vmem:[#allocation10 + $0x280] sm:$0xff]
    %v482 = vld [vmem:[#allocation10 + $0x288] sm:$0xff]
    %v483 = vld [vmem:[#allocation10 + $0x290] sm:$0xff]
    %v484 = vld [vmem:[#allocation10 + $0x298] sm:$0xff]
    %v485 = vld [vmem:[#allocation10 + $0x2a0] sm:$0xff]
    %v486 = vld [vmem:[#allocation10 + $0x2a8] sm:$0xff]
    %v487 = vld [vmem:[#allocation10 + $0x2b0] sm:$0xff]
    %v488 = vld [vmem:[#allocation10 + $0x2b8] sm:$0xff]
    %v489 = vld [vmem:[#allocation10 + $0x2c0] sm:$0xff]
    %v490 = vld [vmem:[#allocation10 + $0x2c8] sm:$0xff]
    %v491 = vld [vmem:[#allocation10 + $0x2d0] sm:$0xff]
    %v492 = vld [vmem:[#allocation10 + $0x2d8] sm:$0xff]
    %v493 = vld [vmem:[#allocation10 + $0x2e0] sm:$0xff]
    %v494 = vld [vmem:[#allocation10 + $0x2e8] sm:$0xff]
    %v495 = vld [vmem:[#allocation10 + $0x2f0] sm:$0xff]
    %v496 = vld [vmem:[#allocation10 + $0x2f8] sm:$0xff]
    %v497 = vld [vmem:[#allocation10 + $0x300] sm:$0xff]
    %v498 = vld [vmem:[#allocation10 + $0x308] sm:$0xff]
    %v499 = vld [vmem:[#allocation10 + $0x310] sm:$0xff]
    %v500 = vld [vmem:[#allocation10 + $0x318] sm:$0xff]
    %v501 = vld [vmem:[#allocation10 + $0x320] sm:$0xff]
    %v502 = vld [vmem:[#allocation10 + $0x328] sm:$0xff]
    %v503 = vld [vmem:[#allocation10 + $0x330] sm:$0xff]
    %v504 = vld [vmem:[#allocation10 + $0x338] sm:$0xff]
    %v505 = vld [vmem:[#allocation10 + $0x340] sm:$0xff]
    %v506 = vld [vmem:[#allocation10 + $0x348] sm:$0xff]
    %v507 = vld [vmem:[#allocation10 + $0x350] sm:$0xff]
    %v508 = vld [vmem:[#allocation10 + $0x358] sm:$0xff]
    %v509 = vld [vmem:[#allocation10 + $0x360] sm:$0xff]
    %v510 = vld [vmem:[#allocation10 + $0x368] sm:$0xff]
    %v511 = vld [vmem:[#allocation10 + $0x370] sm:$0xff]
    %v512 = vld [vmem:[#allocation10 + $0x378] sm:$0xff]
    %v513 = vld [vmem:[#allocation10 + $0x380] sm:$0xff]
    %v514 = vld [vmem:[#allocation10 + $0x388] sm:$0xff]
    %v515 = vld [vmem:[#allocation10 + $0x390] sm:$0xff]
    %v516 = vld [vmem:[#allocation10 + $0x398] sm:$0xff]
    %v517 = vld [vmem:[#allocation10 + $0x3a0] sm:$0xff]
    %v518 = vld [vmem:[#allocation10 + $0x3a8] sm:$0xff]
    %v519 = vld [vmem:[#allocation10 + $0x3b0] sm:$0xff]
    %v520 = vld [vmem:[#allocation10 + $0x3b8] sm:$0xff]
    %v521 = vld [vmem:[#allocation10 + $0x3c0] sm:$0xff]
    %v522 = vld [vmem:[#allocation10 + $0x3c8] sm:$0xff]
    %v523 = vld [vmem:[#allocation10 + $0x3d0] sm:$0xff]
    %v524 = vld [vmem:[#allocation10 + $0x3d8] sm:$0xff]
    %v525 = vld [vmem:[#allocation10 + $0x3e0] sm:$0xff]
    %v526 = vld [vmem:[#allocation10 + $0x3e8] sm:$0xff]
    %v527 = vld [vmem:[#allocation10 + $0x3f0] sm:$0xff]
    %v528 = vld [vmem:[#allocation10 + $0x3f8] sm:$0xff]
    %v529 = vld [vmem:[#allocation10 + $0x400] sm:$0xff]
    %v530 = vld [vmem:[#allocation10 + $0x408] sm:$0xff]
    %v531 = vld [vmem:[#allocation10 + $0x410] sm:$0xff]
    %v532 = vld [vmem:[#allocation10 + $0x418] sm:$0xff]
    %v533 = vld [vmem:[#allocation10 + $0x420] sm:$0xff]
    %v534 = vld [vmem:[#allocation10 + $0x428] sm:$0xff]
    %v535 = vld [vmem:[#allocation10 + $0x430] sm:$0xff]
    %v536 = vld [vmem:[#allocation10 + $0x438] sm:$0xff]
    %v537 = vld [vmem:[#allocation10 + $0x440] sm:$0xff]
    %v538 = vld [vmem:[#allocation10 + $0x448] sm:$0xff]
    %v539 = vld [vmem:[#allocation10 + $0x450] sm:$0xff]
    %v540 = vld [vmem:[#allocation10 + $0x458] sm:$0xff]
    %v541 = vld [vmem:[#allocation10 + $0x460] sm:$0xff]
    %v542 = vld [vmem:[#allocation10 + $0x468] sm:$0xff]
    %v543 = vld [vmem:[#allocation10 + $0x470] sm:$0xff]
    %v544 = vld [vmem:[#allocation10 + $0x478] sm:$0xff]
    %v545 = vld [vmem:[#allocation10 + $0x480] sm:$0xff]
    %v546 = vld [vmem:[#allocation10 + $0x488] sm:$0xff]
    %v547 = vld [vmem:[#allocation10 + $0x490] sm:$0xff]
    %v548 = vld [vmem:[#allocation10 + $0x498] sm:$0xff]
    %v549 = vld [vmem:[#allocation10 + $0x4a0] sm:$0xff]
    %v550 = vld [vmem:[#allocation10 + $0x4a8] sm:$0xff]
    %v551 = vld [vmem:[#allocation10 + $0x4b0] sm:$0xff]
    %v552 = vld [vmem:[#allocation10 + $0x4b8] sm:$0xff]
    %v553 = vld [vmem:[#allocation10 + $0x4c0] sm:$0xff]
    %v554 = vld [vmem:[#allocation10 + $0x4c8] sm:$0xff]
    %v555 = vld [vmem:[#allocation10 + $0x4d0] sm:$0xff]
    %v556 = vld [vmem:[#allocation10 + $0x4d8] sm:$0xff]
    %v557 = vld [vmem:[#allocation10 + $0x4e0] sm:$0xff]
    %v558 = vld [vmem:[#allocation10 + $0x4e8] sm:$0xff]
    %v559 = vld [vmem:[#allocation10 + $0x4f0] sm:$0xff]
    %v560 = vld [vmem:[#allocation10 + $0x4f8] sm:$0xff]
    %v561 = vld [vmem:[#allocation10 + $0x500] sm:$0xff]
    %v562 = vld [vmem:[#allocation10 + $0x508] sm:$0xff]
    %v563 = vld [vmem:[#allocation10 + $0x510] sm:$0xff]
    %v564 = vld [vmem:[#allocation10 + $0x518] sm:$0xff]
    %v565 = vld [vmem:[#allocation10 + $0x520] sm:$0xff]
    %v566 = vld [vmem:[#allocation10 + $0x528] sm:$0xff]
    %v567 = vld [vmem:[#allocation10 + $0x530] sm:$0xff]
    %v568 = vld [vmem:[#allocation10 + $0x538] sm:$0xff]
    %v569 = vld [vmem:[#allocation10 + $0x540] sm:$0xff]
    %v570 = vld [vmem:[#allocation10 + $0x548] sm:$0xff]
    %v571 = vld [vmem:[#allocation10 + $0x550] sm:$0xff]
    %v572 = vld [vmem:[#allocation10 + $0x558] sm:$0xff]
    %v573 = vld [vmem:[#allocation10 + $0x560] sm:$0xff]
    %v574 = vld [vmem:[#allocation10 + $0x568] sm:$0xff]
    %v575 = vld [vmem:[#allocation10 + $0x570] sm:$0xff]
    %v576 = vld [vmem:[#allocation10 + $0x578] sm:$0xff]
    %v577 = vld [vmem:[#allocation10 + $0x580] sm:$0xff]
    %v578 = vld [vmem:[#allocation10 + $0x588] sm:$0xff]
    %v579 = vld [vmem:[#allocation10 + $0x590] sm:$0xff]
    %v580 = vld [vmem:[#allocation10 + $0x598] sm:$0xff]
    %v581 = vld [vmem:[#allocation10 + $0x5a0] sm:$0xff]
    %v582 = vld [vmem:[#allocation10 + $0x5a8] sm:$0xff]
    %v583 = vld [vmem:[#allocation10 + $0x5b0] sm:$0xff]
    %v584 = vld [vmem:[#allocation10 + $0x5b8] sm:$0xff]
    %v585 = vld [vmem:[#allocation10 + $0x5c0] sm:$0xff]
    %v586 = vld [vmem:[#allocation10 + $0x5c8] sm:$0xff]
    %v587 = vld [vmem:[#allocation10 + $0x5d0] sm:$0xff]
    %v588 = vld [vmem:[#allocation10 + $0x5d8] sm:$0xff]
    %v589 = vld [vmem:[#allocation10 + $0x5e0] sm:$0xff]
    %v590 = vld [vmem:[#allocation10 + $0x5e8] sm:$0xff]
    %v591 = vld [vmem:[#allocation10 + $0x5f0] sm:$0xff]
    %v592 = vld [vmem:[#allocation10 + $0x5f8] sm:$0xff]
    %v593 = vld [vmem:[#allocation10 + $0x600] sm:$0xff]
    %v594 = vld [vmem:[#allocation10 + $0x608] sm:$0xff]
    %v595 = vld [vmem:[#allocation10 + $0x610] sm:$0xff]
    %v596 = vld [vmem:[#allocation10 + $0x618] sm:$0xff]
    %v597 = vld [vmem:[#allocation10 + $0x620] sm:$0xff]
    %v598 = vld [vmem:[#allocation10 + $0x628] sm:$0xff]
    %v599 = vld [vmem:[#allocation10 + $0x630] sm:$0xff]
    %v600 = vld [vmem:[#allocation10 + $0x638] sm:$0xff]
    %v601 = vld [vmem:[#allocation10 + $0x640] sm:$0xff]
    %v602 = vld [vmem:[#allocation10 + $0x648] sm:$0xff]
    %v603 = vld [vmem:[#allocation10 + $0x650] sm:$0xff]
    %v604 = vld [vmem:[#allocation10 + $0x658] sm:$0xff]
    %v605 = vld [vmem:[#allocation10 + $0x660] sm:$0xff]
    %v606 = vld [vmem:[#allocation10 + $0x668] sm:$0xff]
    %v607 = vld [vmem:[#allocation10 + $0x670] sm:$0xff]
    %v608 = vld [vmem:[#allocation10 + $0x678] sm:$0xff]
    %v609 = vld [vmem:[#allocation10 + $0x680] sm:$0xff]
    %v610 = vld [vmem:[#allocation10 + $0x688] sm:$0xff]
    %v611 = vld [vmem:[#allocation10 + $0x690] sm:$0xff]
    %v612 = vld [vmem:[#allocation10 + $0x698] sm:$0xff]
    %v613 = vld [vmem:[#allocation10 + $0x6a0] sm:$0xff]
    %v614 = vld [vmem:[#allocation10 + $0x6a8] sm:$0xff]
    %v615 = vld [vmem:[#allocation10 + $0x6b0] sm:$0xff]
    %v616 = vld [vmem:[#allocation10 + $0x6b8] sm:$0xff]
    %v617 = vld [vmem:[#allocation10 + $0x6c0] sm:$0xff]
    %v618 = vld [vmem:[#allocation10 + $0x6c8] sm:$0xff]
    %v619 = vld [vmem:[#allocation10 + $0x6d0] sm:$0xff]
    %v620 = vld [vmem:[#allocation10 + $0x6d8] sm:$0xff]
    %v621 = vld [vmem:[#allocation10 + $0x6e0] sm:$0xff]
    %v622 = vld [vmem:[#allocation10 + $0x6e8] sm:$0xff]
    %v623 = vld [vmem:[#allocation10 + $0x6f0] sm:$0xff]
    %v624 = vld [vmem:[#allocation10 + $0x6f8] sm:$0xff]
    %v625 = vld [vmem:[#allocation10 + $0x700] sm:$0xff]
    %v626 = vld [vmem:[#allocation10 + $0x708] sm:$0xff]
    %v627 = vld [vmem:[#allocation10 + $0x710] sm:$0xff]
    %v628 = vld [vmem:[#allocation10 + $0x718] sm:$0xff]
    %v629 = vld [vmem:[#allocation10 + $0x720] sm:$0xff]
    %v630 = vld [vmem:[#allocation10 + $0x728] sm:$0xff]
    %v631 = vld [vmem:[#allocation10 + $0x730] sm:$0xff]
    %v632 = vld [vmem:[#allocation10 + $0x738] sm:$0xff]
    %v633 = vld [vmem:[#allocation10 + $0x740] sm:$0xff]
    %v634 = vld [vmem:[#allocation10 + $0x748] sm:$0xff]
    %v635 = vld [vmem:[#allocation10 + $0x750] sm:$0xff]
    %v636 = vld [vmem:[#allocation10 + $0x758] sm:$0xff]
    %v637 = vld [vmem:[#allocation10 + $0x760] sm:$0xff]
    %v638 = vld [vmem:[#allocation10 + $0x768] sm:$0xff]
    %v639 = vld [vmem:[#allocation10 + $0x770] sm:$0xff]
    %v640 = vld [vmem:[#allocation10 + $0x778] sm:$0xff]
    %v641 = vld [vmem:[#allocation10 + $0x780] sm:$0xff]
    %v642 = vld [vmem:[#allocation10 + $0x788] sm:$0xff]
    %v643 = vld [vmem:[#allocation10 + $0x790] sm:$0xff]
    %v644 = vld [vmem:[#allocation10 + $0x798] sm:$0xff]
    %v645 = vld [vmem:[#allocation10 + $0x7a0] sm:$0xff]
    %v646 = vld [vmem:[#allocation10 + $0x7a8] sm:$0xff]
    %v647 = vld [vmem:[#allocation10 + $0x7b0] sm:$0xff]
    %v648 = vld [vmem:[#allocation10 + $0x7b8] sm:$0xff]
    %v649 = vld [vmem:[#allocation10 + $0x7c0] sm:$0xff]
    %v650 = vld [vmem:[#allocation10 + $0x7c8] sm:$0xff]
    %v651 = vld [vmem:[#allocation10 + $0x7d0] sm:$0xff]
    %v652 = vld [vmem:[#allocation10 + $0x7d8] sm:$0xff]
    %v653 = vld [vmem:[#allocation10 + $0x7e0] sm:$0xff]
    %v654 = vld [vmem:[#allocation10 + $0x7e8] sm:$0xff]
    %v655 = vld [vmem:[#allocation10 + $0x7f0] sm:$0xff]
    %v656 = vld [vmem:[#allocation10 + $0x7f8] sm:$0xff]
    %v657 = vld [vmem:[%s6] sm:$0xf]
    %v658 = vld [vmem:[#allocation11] sm:$0xff]
    %v659 = vld [vmem:[#allocation11 + $0x8] sm:$0xff]
    %v660 = vld [vmem:[#allocation11 + $0x10] sm:$0xff]
    %v661 = vld [vmem:[#allocation11 + $0x18] sm:$0xff]
    %v662 = vld [vmem:[#allocation11 + $0x20] sm:$0xff]
    %v663 = vld [vmem:[#allocation11 + $0x28] sm:$0xff]
    %v664 = vld [vmem:[#allocation11 + $0x30] sm:$0xff]
    %v665 = vld [vmem:[#allocation11 + $0x38] sm:$0xff]
    %v666 = vld [vmem:[#allocation11 + $0x40] sm:$0xff]
    %v667 = vld [vmem:[#allocation11 + $0x48] sm:$0xff]
    %v668 = vld [vmem:[#allocation11 + $0x50] sm:$0xff]
    %v669 = vld [vmem:[#allocation11 + $0x58] sm:$0xff]
    %v670 = vld [vmem:[#allocation11 + $0x60] sm:$0xff]
    %v671 = vld [vmem:[#allocation11 + $0x68] sm:$0xff]
    %v672 = vld [vmem:[#allocation11 + $0x70] sm:$0xff]
    %v673 = vld [vmem:[#allocation11 + $0x78] sm:$0xff]
    %v674 = vld [vmem:[#allocation11 + $0x80] sm:$0xff]
    %v675 = vld [vmem:[#allocation11 + $0x88] sm:$0xff]
    %v676 = vld [vmem:[#allocation11 + $0x90] sm:$0xff]
    %v677 = vld [vmem:[#allocation11 + $0x98] sm:$0xff]
    %v678 = vld [vmem:[#allocation11 + $0xa0] sm:$0xff]
    %v679 = vld [vmem:[#allocation11 + $0xa8] sm:$0xff]
    %v680 = vld [vmem:[#allocation11 + $0xb0] sm:$0xff]
    %v681 = vld [vmem:[#allocation11 + $0xb8] sm:$0xff]
    %v682 = vld [vmem:[#allocation11 + $0xc0] sm:$0xff]
    %v683 = vld [vmem:[#allocation11 + $0xc8] sm:$0xff]
    %v684 = vld [vmem:[#allocation11 + $0xd0] sm:$0xff]
    %v685 = vld [vmem:[#allocation11 + $0xd8] sm:$0xff]
    %v686 = vld [vmem:[#allocation11 + $0xe0] sm:$0xff]
    %v687 = vld [vmem:[#allocation11 + $0xe8] sm:$0xff]
    %v688 = vld [vmem:[#allocation11 + $0xf0] sm:$0xff]
    %v689 = vld [vmem:[#allocation11 + $0xf8] sm:$0xff]
    %v690 = vld [vmem:[#allocation11 + $0x100] sm:$0xff]
    %v691 = vld [vmem:[#allocation11 + $0x108] sm:$0xff]
    %v692 = vld [vmem:[#allocation11 + $0x110] sm:$0xff]
    %v693 = vld [vmem:[#allocation11 + $0x118] sm:$0xff]
    %v694 = vld [vmem:[#allocation11 + $0x120] sm:$0xff]
    %v695 = vld [vmem:[#allocation11 + $0x128] sm:$0xff]
    %v696 = vld [vmem:[#allocation11 + $0x130] sm:$0xff]
    %v697 = vld [vmem:[#allocation11 + $0x138] sm:$0xff]
    %v698 = vld [vmem:[#allocation11 + $0x140] sm:$0xff]
    %v699 = vld [vmem:[#allocation11 + $0x148] sm:$0xff]
    %v700 = vld [vmem:[#allocation11 + $0x150] sm:$0xff]
    %v701 = vld [vmem:[#allocation11 + $0x158] sm:$0xff]
    %v702 = vld [vmem:[#allocation11 + $0x160] sm:$0xff]
    %v703 = vld [vmem:[#allocation11 + $0x168] sm:$0xff]
    %v704 = vld [vmem:[#allocation11 + $0x170] sm:$0xff]
    %v705 = vld [vmem:[#allocation11 + $0x178] sm:$0xff]
    %v706 = vld [vmem:[#allocation11 + $0x180] sm:$0xff]
    %v707 = vld [vmem:[#allocation11 + $0x188] sm:$0xff]
    %v708 = vld [vmem:[#allocation11 + $0x190] sm:$0xff]
    %v709 = vld [vmem:[#allocation11 + $0x198] sm:$0xff]
    %v710 = vld [vmem:[#allocation11 + $0x1a0] sm:$0xff]
    %v711 = vld [vmem:[#allocation11 + $0x1a8] sm:$0xff]
    %v712 = vld [vmem:[#allocation11 + $0x1b0] sm:$0xff]
    %v713 = vld [vmem:[#allocation11 + $0x1b8] sm:$0xff]
    %v714 = vld [vmem:[#allocation11 + $0x1c0] sm:$0xff]
    %v715 = vld [vmem:[#allocation11 + $0x1c8] sm:$0xff]
    %v716 = vld [vmem:[#allocation11 + $0x1d0] sm:$0xff]
    %v717 = vld [vmem:[#allocation11 + $0x1d8] sm:$0xff]
    %v718 = vld [vmem:[#allocation11 + $0x1e0] sm:$0xff]
    %v719 = vld [vmem:[#allocation11 + $0x1e8] sm:$0xff]
    %v720 = vld [vmem:[#allocation11 + $0x1f0] sm:$0xff]
    %v721 = vld [vmem:[#allocation11 + $0x1f8] sm:$0xff]
    %v722 = vld [vmem:[%s8] sm:$0x1]
    %v723 = vlaneseq
    %v724 = vand.u32 %v723, 127
    %vm725 = vcmp.lt.s32.totalorder %v724, 8
    %v726 = vld [vmem:[#allocation2] sm:$0xff]
    %v728 = vlaneseq
    %v729 = vshrl.u32 %v728, 7
    %v730 = vsub.s32 0, %v729
    %v731 = vrot.slane %v143, %v730
    %v732 = vlaneseq
    %v733 = vshrl.u32 %v732, 7
    %v734 = vsub.s32 1, %v733
    %v735 = vrot.slane %v143, %v734
    %v736 = vlaneseq
    %v737 = vshrl.u32 %v736, 7
    %v738 = vsub.s32 2, %v737
    %v739 = vrot.slane %v143, %v738
    %v740 = vlaneseq
    %v741 = vshrl.u32 %v740, 7
    %v742 = vsub.s32 3, %v741
    %v743 = vrot.slane %v143, %v742
    %vm748 = vcmask 523264
    %v750 = vsel %vm748, %v726, 0
    %752 = vmatprep.subr.mxu0 0.0
    %753 = vmatpush1.msra.mxu0 0.0
    %754 = vmatprep.subr.mxu0 0.0
    %755 = vmatpush1.msra.mxu0 0.0
    %756 = vmatprep.subr.mxu0 0.0
    %757 = vmatpush1.msra.mxu0 0.0
    %758 = vmatprep.subr.mxu0 0.0
    %759 = vmatpush1.msra.mxu0 0.0
    %760 = vmatprep.subr.mxu0 0.0
    %761 = vmatpush1.msra.mxu0 0.0
    %762 = vmatprep.subr.mxu0 0.0
    %763 = vmatpush1.msra.mxu0 0.0
    %764 = vmatprep.subr.mxu0 0.0
    %765 = vmatpush1.msra.mxu0 0.0
    %766 = vmatprep.subr.mxu0 0.0
    %767 = vmatpush1.msra.mxu0 0.0
    %768 = vmatprep.subr.mxu0 %v140
    %769 = vmatpush1.msra.mxu0 %v139
    %770 = vmatprep.subr.mxu0 %v136
    %771 = vmatpush1.msra.mxu0 %v135
    %772 = vmatprep.subr.mxu0 %v132
    %773 = vmatpush1.msra.mxu0 %v131
    %774 = vmatprep.subr.mxu0 %v128
    %775 = vmatpush1.msra.mxu0 %v127
    %776 = vmatprep.subr.mxu0 %v124
    %777 = vmatpush1.msra.mxu0 %v123
    %778 = vmatprep.subr.mxu0 %v120
    %779 = vmatpush1.msra.mxu0 %v119
    %780 = vmatprep.subr.mxu0 %v116
    %781 = vmatpush1.msra.mxu0 %v115
    %782 = vmatprep.subr.mxu0 %v112
    %783 = vmatpush1.msra.mxu0 %v111
    %784 = vmatprep.subr.mxu0 0.0
    %785 = vmatpush2.msra.mxu0 0.0
    %786 = vmatprep.subr.mxu0 0.0
    %787 = vmatpush2.msra.mxu0 0.0
    %788 = vmatprep.subr.mxu0 0.0
    %789 = vmatpush2.msra.mxu0 0.0
    %790 = vmatprep.subr.mxu0 0.0
    %791 = vmatpush2.msra.mxu0 0.0
    %792 = vmatprep.subr.mxu0 0.0
    %793 = vmatpush2.msra.mxu0 0.0
    %794 = vmatprep.subr.mxu0 0.0
    %795 = vmatpush2.msra.mxu0 0.0
    %796 = vmatprep.subr.mxu0 0.0
    %797 = vmatpush2.msra.mxu0 0.0
    %798 = vmatprep.subr.mxu0 0.0
    %799 = vmatpush2.msra.mxu0 0.0
    %800 = vmatprep.subr.mxu0 0.0
    %801 = vmatpush2.msra.mxu0 0.0
    %802 = vmatprep.subr.mxu0 0.0
    %803 = vmatpush2.msra.mxu0 0.0
    %804 = vmatprep.subr.mxu0 0.0
    %805 = vmatpush2.msra.mxu0 0.0
    %806 = vmatprep.subr.mxu0 0.0
    %807 = vmatpush2.msra.mxu0 0.0
    %808 = vmatprep.subr.mxu0 0.0
    %809 = vmatpush2.msra.mxu0 0.0
    %810 = vmatprep.subr.mxu0 0.0
    %811 = vmatpush2.msra.mxu0 0.0
    %812 = vmatprep.subr.mxu0 0.0
    %813 = vmatpush2.msra.mxu0 0.0
    %814 = vmatprep.subr.mxu0 0.0
    %815 = vmatpush2.msra.mxu0 0.0
    %816 = vmatprep.mubr.f32.mxu0 0.0
    %817 = vmatmul.mubr.f32.gmra.mxu0 %v750
    %v818 = vpop.f32.mrf.mxu0
    %v819 = vadd.f32 %v731, %v818
    %v820 = vpop.f32.mrf.mxu0
    %v821 = vadd.f32 %v735, %v820
    %822 = vdwg.mxu0
    %823 = vmatprep.subr.mxu0 0.0
    %824 = vmatpush1.msra.mxu0 0.0
    %825 = vmatprep.subr.mxu0 0.0
    %826 = vmatpush1.msra.mxu0 0.0
    %827 = vmatprep.subr.mxu0 0.0
    %828 = vmatpush1.msra.mxu0 0.0
    %829 = vmatprep.subr.mxu0 0.0
    %830 = vmatpush1.msra.mxu0 0.0
    %831 = vmatprep.subr.mxu0 0.0
    %832 = vmatpush1.msra.mxu0 0.0
    %833 = vmatprep.subr.mxu0 0.0
    %834 = vmatpush1.msra.mxu0 0.0
    %835 = vmatprep.subr.mxu0 0.0
    %836 = vmatpush1.msra.mxu0 0.0
    %837 = vmatprep.subr.mxu0 0.0
    %838 = vmatpush1.msra.mxu0 0.0
    %839 = vmatprep.subr.mxu0 %v142
    %840 = vmatpush1.msra.mxu0 %v141
    %841 = vmatprep.subr.mxu0 %v138
    %842 = vmatpush1.msra.mxu0 %v137
    %843 = vmatprep.subr.mxu0 %v134
    %844 = vmatpush1.msra.mxu0 %v133
    %845 = vmatprep.subr.mxu0 %v130
    %846 = vmatpush1.msra.mxu0 %v129
    %847 = vmatprep.subr.mxu0 %v126
    %848 = vmatpush1.msra.mxu0 %v125
    %849 = vmatprep.subr.mxu0 %v122
    %850 = vmatpush1.msra.mxu0 %v121
    %851 = vmatprep.subr.mxu0 %v118
    %852 = vmatpush1.msra.mxu0 %v117
    %853 = vmatprep.subr.mxu0 %v114
    %854 = vmatpush1.msra.mxu0 %v113
    %855 = vmatprep.subr.mxu0 0.0
    %856 = vmatpush2.msra.mxu0 0.0
    %857 = vmatprep.subr.mxu0 0.0
    %858 = vmatpush2.msra.mxu0 0.0
    %859 = vmatprep.subr.mxu0 0.0
    %860 = vmatpush2.msra.mxu0 0.0
    %861 = vmatprep.subr.mxu0 0.0
    %862 = vmatpush2.msra.mxu0 0.0
    %863 = vmatprep.subr.mxu0 0.0
    %864 = vmatpush2.msra.mxu0 0.0
    %865 = vmatprep.subr.mxu0 0.0
    %866 = vmatpush2.msra.mxu0 0.0
    %867 = vmatprep.subr.mxu0 0.0
    %868 = vmatpush2.msra.mxu0 0.0
    %869 = vmatprep.subr.mxu0 0.0
    %870 = vmatpush2.msra.mxu0 0.0
    %871 = vmatprep.subr.mxu0 0.0
    %872 = vmatpush2.msra.mxu0 0.0
    %873 = vmatprep.subr.mxu0 0.0
    %874 = vmatpush2.msra.mxu0 0.0
    %875 = vmatprep.subr.mxu0 0.0
    %876 = vmatpush2.msra.mxu0 0.0
    %877 = vmatprep.subr.mxu0 0.0
    %878 = vmatpush2.msra.mxu0 0.0
    %879 = vmatprep.subr.mxu0 0.0
    %880 = vmatpush2.msra.mxu0 0.0
    %881 = vmatprep.subr.mxu0 0.0
    %882 = vmatpush2.msra.mxu0 0.0
    %883 = vmatprep.subr.mxu0 0.0
    %884 = vmatpush2.msra.mxu0 0.0
    %885 = vmatprep.subr.mxu0 0.0
    %886 = vmatpush2.msra.mxu0 0.0
    %887 = vmatprep.mubr.f32.mxu0 0.0
    %888 = vmatmul.mubr.f32.gmra.mxu0 %v750
    %v889 = vpop.f32.mrf.mxu0
    %v890 = vadd.f32 %v739, %v889
    %v891 = vpop.f32.mrf.mxu0
    %v892 = vadd.f32 %v743, %v891
    %893 = vdwg.mxu0
    %v894 = vmax.f32 %v819, 0.0
    %v895 = vmax.f32 %v821, 0.0
    %v896 = vmax.f32 %v890, 0.0
    %v897 = vmax.f32 %v892, 0.0
    %v899 = vlaneseq
    %v900 = vshrl.u32 %v899, 7
    %v901 = vsub.s32 0, %v900
    %v902 = vrot.slane %v400, %v901
    %v903 = vlaneseq
    %v904 = vshrl.u32 %v903, 7
    %v905 = vsub.s32 1, %v904
    %v906 = vrot.slane %v400, %v905
    %v907 = vlaneseq
    %v908 = vshrl.u32 %v907, 7
    %v909 = vsub.s32 2, %v908
    %v910 = vrot.slane %v400, %v909
    %v911 = vlaneseq
    %v912 = vshrl.u32 %v911, 7
    %v913 = vsub.s32 3, %v912
    %v914 = vrot.slane %v400, %v913
    %919 = vmatprep.subr.mxu0 %v205
    %920 = vmatpush1.msra.mxu0 %v204
    %921 = vmatprep.subr.mxu0 %v201
    %922 = vmatpush1.msra.mxu0 %v200
    %923 = vmatprep.subr.mxu0 %v197
    %924 = vmatpush1.msra.mxu0 %v196
    %925 = vmatprep.subr.mxu0 %v193
    %926 = vmatpush1.msra.mxu0 %v192
    %927 = vmatprep.subr.mxu0 %v189
    %928 = vmatpush1.msra.mxu0 %v188
    %929 = vmatprep.subr.mxu0 %v185
    %930 = vmatpush1.msra.mxu0 %v184
    %931 = vmatprep.subr.mxu0 %v181
    %932 = vmatpush1.msra.mxu0 %v180
    %933 = vmatprep.subr.mxu0 %v177
    %934 = vmatpush1.msra.mxu0 %v176
    %935 = vmatprep.subr.mxu0 %v173
    %936 = vmatpush1.msra.mxu0 %v172
    %937 = vmatprep.subr.mxu0 %v169
    %938 = vmatpush1.msra.mxu0 %v168
    %939 = vmatprep.subr.mxu0 %v165
    %940 = vmatpush1.msra.mxu0 %v164
    %941 = vmatprep.subr.mxu0 %v161
    %942 = vmatpush1.msra.mxu0 %v160
    %943 = vmatprep.subr.mxu0 %v157
    %944 = vmatpush1.msra.mxu0 %v156
    %945 = vmatprep.subr.mxu0 %v153
    %946 = vmatpush1.msra.mxu0 %v152
    %947 = vmatprep.subr.mxu0 %v149
    %948 = vmatpush1.msra.mxu0 %v148
    %949 = vmatprep.subr.mxu0 %v145
    %950 = vmatpush1.msra.mxu0 %v144
    %951 = vmatprep.subr.mxu0 %v269
    %952 = vmatpush2.msra.mxu0 %v268
    %953 = vmatprep.subr.mxu0 %v265
    %954 = vmatpush2.msra.mxu0 %v264
    %955 = vmatprep.subr.mxu0 %v261
    %956 = vmatpush2.msra.mxu0 %v260
    %957 = vmatprep.subr.mxu0 %v257
    %958 = vmatpush2.msra.mxu0 %v256
    %959 = vmatprep.subr.mxu0 %v253
    %960 = vmatpush2.msra.mxu0 %v252
    %961 = vmatprep.subr.mxu0 %v249
    %962 = vmatpush2.msra.mxu0 %v248
    %963 = vmatprep.subr.mxu0 %v245
    %964 = vmatpush2.msra.mxu0 %v244
    %965 = vmatprep.subr.mxu0 %v241
    %966 = vmatpush2.msra.mxu0 %v240
    %967 = vmatprep.subr.mxu0 %v237
    %968 = vmatpush2.msra.mxu0 %v236
    %969 = vmatprep.subr.mxu0 %v233
    %970 = vmatpush2.msra.mxu0 %v232
    %971 = vmatprep.subr.mxu0 %v229
    %972 = vmatpush2.msra.mxu0 %v228
    %973 = vmatprep.subr.mxu0 %v225
    %974 = vmatpush2.msra.mxu0 %v224
    %975 = vmatprep.subr.mxu0 %v221
    %976 = vmatpush2.msra.mxu0 %v220
    %977 = vmatprep.subr.mxu0 %v217
    %978 = vmatpush2.msra.mxu0 %v216
    %979 = vmatprep.subr.mxu0 %v213
    %980 = vmatpush2.msra.mxu0 %v212
    %981 = vmatprep.subr.mxu0 %v209
    %982 = vmatpush2.msra.mxu0 %v208
    %983 = vmatprep.mubr.f32.mxu0 %v895
    %984 = vmatmul.mubr.f32.gmra.mxu0 %v894
    %v985 = vpop.f32.mrf.mxu0
    %v986 = vadd.f32 %v902, %v985
    %v987 = vpop.f32.mrf.mxu0
    %v988 = vadd.f32 %v906, %v987
    %989 = vdwg.mxu0
    %990 = vmatprep.subr.mxu0 %v333
    %991 = vmatpush1.msra.mxu0 %v332
    %992 = vmatprep.subr.mxu0 %v329
    %993 = vmatpush1.msra.mxu0 %v328
    %994 = vmatprep.subr.mxu0 %v325
    %995 = vmatpush1.msra.mxu0 %v324
    %996 = vmatprep.subr.mxu0 %v321
    %997 = vmatpush1.msra.mxu0 %v320
    %998 = vmatprep.subr.mxu0 %v317
    %999 = vmatpush1.msra.mxu0 %v316
    %1000 = vmatprep.subr.mxu0 %v313
    %1001 = vmatpush1.msra.mxu0 %v312
    %1002 = vmatprep.subr.mxu0 %v309
    %1003 = vmatpush1.msra.mxu0 %v308
    %1004 = vmatprep.subr.mxu0 %v305
    %1005 = vmatpush1.msra.mxu0 %v304
    %1006 = vmatprep.subr.mxu0 %v301
    %1007 = vmatpush1.msra.mxu0 %v300
    %1008 = vmatprep.subr.mxu0 %v297
    %1009 = vmatpush1.msra.mxu0 %v296
    %1010 = vmatprep.subr.mxu0 %v293
    %1011 = vmatpush1.msra.mxu0 %v292
    %1012 = vmatprep.subr.mxu0 %v289
    %1013 = vmatpush1.msra.mxu0 %v288
    %1014 = vmatprep.subr.mxu0 %v285
    %1015 = vmatpush1.msra.mxu0 %v284
    %1016 = vmatprep.subr.mxu0 %v281
    %1017 = vmatpush1.msra.mxu0 %v280
    %1018 = vmatprep.subr.mxu0 %v277
    %1019 = vmatpush1.msra.mxu0 %v276
    %1020 = vmatprep.subr.mxu0 %v273
    %1021 = vmatpush1.msra.mxu0 %v272
    %1022 = vmatprep.subr.mxu0 %v397
    %1023 = vmatpush2.msra.mxu0 %v396
    %1024 = vmatprep.subr.mxu0 %v393
    %1025 = vmatpush2.msra.mxu0 %v392
    %1026 = vmatprep.subr.mxu0 %v389
    %1027 = vmatpush2.msra.mxu0 %v388
    %1028 = vmatprep.subr.mxu0 %v385
    %1029 = vmatpush2.msra.mxu0 %v384
    %1030 = vmatprep.subr.mxu0 %v381
    %1031 = vmatpush2.msra.mxu0 %v380
    %1032 = vmatprep.subr.mxu0 %v377
    %1033 = vmatpush2.msra.mxu0 %v376
    %1034 = vmatprep.subr.mxu0 %v373
    %1035 = vmatpush2.msra.mxu0 %v372
    %1036 = vmatprep.subr.mxu0 %v369
    %1037 = vmatpush2.msra.mxu0 %v368
    %1038 = vmatprep.subr.mxu0 %v365
    %1039 = vmatpush2.msra.mxu0 %v364
    %1040 = vmatprep.subr.mxu0 %v361
    %1041 = vmatpush2.msra.mxu0 %v360
    %1042 = vmatprep.subr.mxu0 %v357
    %1043 = vmatpush2.msra.mxu0 %v356
    %1044 = vmatprep.subr.mxu0 %v353
    %1045 = vmatpush2.msra.mxu0 %v352
    %1046 = vmatprep.subr.mxu0 %v349
    %1047 = vmatpush2.msra.mxu0 %v348
    %1048 = vmatprep.subr.mxu0 %v345
    %1049 = vmatpush2.msra.mxu0 %v344
    %1050 = vmatprep.subr.mxu0 %v341
    %1051 = vmatpush2.msra.mxu0 %v340
    %1052 = vmatprep.subr.mxu0 %v337
    %1053 = vmatpush2.msra.mxu0 %v336
    %1054 = vmatprep.mubr.f32.mxu0 %v897
    %1055 = vmatmul.mubr.f32.gmra.mxu0 %v896
    %v1056 = vpop.f32.mrf.mxu0
    %v1057 = vadd.f32 %v986, %v1056
    %v1058 = vpop.f32.mrf.mxu0
    %v1059 = vadd.f32 %v988, %v1058
    %1060 = vdwg.mxu0
    %1061 = vmatprep.subr.mxu0 %v207
    %1062 = vmatpush1.msra.mxu0 %v206
    %1063 = vmatprep.subr.mxu0 %v203
    %1064 = vmatpush1.msra.mxu0 %v202
    %1065 = vmatprep.subr.mxu0 %v199
    %1066 = vmatpush1.msra.mxu0 %v198
    %1067 = vmatprep.subr.mxu0 %v195
    %1068 = vmatpush1.msra.mxu0 %v194
    %1069 = vmatprep.subr.mxu0 %v191
    %1070 = vmatpush1.msra.mxu0 %v190
    %1071 = vmatprep.subr.mxu0 %v187
    %1072 = vmatpush1.msra.mxu0 %v186
    %1073 = vmatprep.subr.mxu0 %v183
    %1074 = vmatpush1.msra.mxu0 %v182
    %1075 = vmatprep.subr.mxu0 %v179
    %1076 = vmatpush1.msra.mxu0 %v178
    %1077 = vmatprep.subr.mxu0 %v175
    %1078 = vmatpush1.msra.mxu0 %v174
    %1079 = vmatprep.subr.mxu0 %v171
    %1080 = vmatpush1.msra.mxu0 %v170
    %1081 = vmatprep.subr.mxu0 %v167
    %1082 = vmatpush1.msra.mxu0 %v166
    %1083 = vmatprep.subr.mxu0 %v163
    %1084 = vmatpush1.msra.mxu0 %v162
    %1085 = vmatprep.subr.mxu0 %v159
    %1086 = vmatpush1.msra.mxu0 %v158
    %1087 = vmatprep.subr.mxu0 %v155
    %1088 = vmatpush1.msra.mxu0 %v154
    %1089 = vmatprep.subr.mxu0 %v151
    %1090 = vmatpush1.msra.mxu0 %v150
    %1091 = vmatprep.subr.mxu0 %v147
    %1092 = vmatpush1.msra.mxu0 %v146
    %1093 = vmatprep.subr.mxu0 %v271
    %1094 = vmatpush2.msra.mxu0 %v270
    %1095 = vmatprep.subr.mxu0 %v267
    %1096 = vmatpush2.msra.mxu0 %v266
    %1097 = vmatprep.subr.mxu0 %v263
    %1098 = vmatpush2.msra.mxu0 %v262
    %1099 = vmatprep.subr.mxu0 %v259
    %1100 = vmatpush2.msra.mxu0 %v258
    %1101 = vmatprep.subr.mxu0 %v255
    %1102 = vmatpush2.msra.mxu0 %v254
    %1103 = vmatprep.subr.mxu0 %v251
    %1104 = vmatpush2.msra.mxu0 %v250
    %1105 = vmatprep.subr.mxu0 %v247
    %1106 = vmatpush2.msra.mxu0 %v246
    %1107 = vmatprep.subr.mxu0 %v243
    %1108 = vmatpush2.msra.mxu0 %v242
    %1109 = vmatprep.subr.mxu0 %v239
    %1110 = vmatpush2.msra.mxu0 %v238
    %1111 = vmatprep.subr.mxu0 %v235
    %1112 = vmatpush2.msra.mxu0 %v234
    %1113 = vmatprep.subr.mxu0 %v231
    %1114 = vmatpush2.msra.mxu0 %v230
    %1115 = vmatprep.subr.mxu0 %v227
    %1116 = vmatpush2.msra.mxu0 %v226
    %1117 = vmatprep.subr.mxu0 %v223
    %1118 = vmatpush2.msra.mxu0 %v222
    %1119 = vmatprep.subr.mxu0 %v219
    %1120 = vmatpush2.msra.mxu0 %v218
    %1121 = vmatprep.subr.mxu0 %v215
    %1122 = vmatpush2.msra.mxu0 %v214
    %1123 = vmatprep.subr.mxu0 %v211
    %1124 = vmatpush2.msra.mxu0 %v210
    %1125 = vmatprep.mubr.f32.mxu0 %v895
    %1126 = vmatmul.mubr.f32.gmra.mxu0 %v894
    %v1127 = vpop.f32.mrf.mxu0
    %v1128 = vadd.f32 %v910, %v1127
    %v1129 = vpop.f32.mrf.mxu0
    %v1130 = vadd.f32 %v914, %v1129
    %1131 = vdwg.mxu0
    %1132 = vmatprep.subr.mxu0 %v335
    %1133 = vmatpush1.msra.mxu0 %v334
    %1134 = vmatprep.subr.mxu0 %v331
    %1135 = vmatpush1.msra.mxu0 %v330
    %1136 = vmatprep.subr.mxu0 %v327
    %1137 = vmatpush1.msra.mxu0 %v326
    %1138 = vmatprep.subr.mxu0 %v323
    %1139 = vmatpush1.msra.mxu0 %v322
    %1140 = vmatprep.subr.mxu0 %v319
    %1141 = vmatpush1.msra.mxu0 %v318
    %1142 = vmatprep.subr.mxu0 %v315
    %1143 = vmatpush1.msra.mxu0 %v314
    %1144 = vmatprep.subr.mxu0 %v311
    %1145 = vmatpush1.msra.mxu0 %v310
    %1146 = vmatprep.subr.mxu0 %v307
    %1147 = vmatpush1.msra.mxu0 %v306
    %1148 = vmatprep.subr.mxu0 %v303
    %1149 = vmatpush1.msra.mxu0 %v302
    %1150 = vmatprep.subr.mxu0 %v299
    %1151 = vmatpush1.msra.mxu0 %v298
    %1152 = vmatprep.subr.mxu0 %v295
    %1153 = vmatpush1.msra.mxu0 %v294
    %1154 = vmatprep.subr.mxu0 %v291
    %1155 = vmatpush1.msra.mxu0 %v290
    %1156 = vmatprep.subr.mxu0 %v287
    %1157 = vmatpush1.msra.mxu0 %v286
    %1158 = vmatprep.subr.mxu0 %v283
    %1159 = vmatpush1.msra.mxu0 %v282
    %1160 = vmatprep.subr.mxu0 %v279
    %1161 = vmatpush1.msra.mxu0 %v278
    %1162 = vmatprep.subr.mxu0 %v275
    %1163 = vmatpush1.msra.mxu0 %v274
    %1164 = vmatprep.subr.mxu0 %v399
    %1165 = vmatpush2.msra.mxu0 %v398
    %1166 = vmatprep.subr.mxu0 %v395
    %1167 = vmatpush2.msra.mxu0 %v394
    %1168 = vmatprep.subr.mxu0 %v391
    %1169 = vmatpush2.msra.mxu0 %v390
    %1170 = vmatprep.subr.mxu0 %v387
    %1171 = vmatpush2.msra.mxu0 %v386
    %1172 = vmatprep.subr.mxu0 %v383
    %1173 = vmatpush2.msra.mxu0 %v382
    %1174 = vmatprep.subr.mxu0 %v379
    %1175 = vmatpush2.msra.mxu0 %v378
    %1176 = vmatprep.subr.mxu0 %v375
    %1177 = vmatpush2.msra.mxu0 %v374
    %1178 = vmatprep.subr.mxu0 %v371
    %1179 = vmatpush2.msra.mxu0 %v370
    %1180 = vmatprep.subr.mxu0 %v367
    %1181 = vmatpush2.msra.mxu0 %v366
    %1182 = vmatprep.subr.mxu0 %v363
    %1183 = vmatpush2.msra.mxu0 %v362
    %1184 = vmatprep.subr.mxu0 %v359
    %1185 = vmatpush2.msra.mxu0 %v358
    %1186 = vmatprep.subr.mxu0 %v355
    %1187 = vmatpush2.msra.mxu0 %v354
    %1188 = vmatprep.subr.mxu0 %v351
    %1189 = vmatpush2.msra.mxu0 %v350
    %1190 = vmatprep.subr.mxu0 %v347
    %1191 = vmatpush2.msra.mxu0 %v346
    %1192 = vmatprep.subr.mxu0 %v343
    %1193 = vmatpush2.msra.mxu0 %v342
    %1194 = vmatprep.subr.mxu0 %v339
    %1195 = vmatpush2.msra.mxu0 %v338
    %1196 = vmatprep.mubr.f32.mxu0 %v897
    %1197 = vmatmul.mubr.f32.gmra.mxu0 %v896
    %v1198 = vpop.f32.mrf.mxu0
    %v1199 = vadd.f32 %v1128, %v1198
    %v1200 = vpop.f32.mrf.mxu0
    %v1201 = vadd.f32 %v1130, %v1200
    %1202 = vdwg.mxu0
    %v1203 = vmax.f32 %v1057, 0.0
    %v1204 = vmax.f32 %v1059, 0.0
    %v1205 = vmax.f32 %v1199, 0.0
    %v1206 = vmax.f32 %v1201, 0.0
    %v1208 = vlaneseq
    %v1209 = vshrl.u32 %v1208, 7
    %v1210 = vsub.s32 0, %v1209
    %v1211 = vrot.slane %v657, %v1210
    %v1212 = vlaneseq
    %v1213 = vshrl.u32 %v1212, 7
    %v1214 = vsub.s32 1, %v1213
    %v1215 = vrot.slane %v657, %v1214
    %v1216 = vlaneseq
    %v1217 = vshrl.u32 %v1216, 7
    %v1218 = vsub.s32 2, %v1217
    %v1219 = vrot.slane %v657, %v1218
    %v1220 = vlaneseq
    %v1221 = vshrl.u32 %v1220, 7
    %v1222 = vsub.s32 3, %v1221
    %v1223 = vrot.slane %v657, %v1222
    %1228 = vmatprep.subr.mxu0 %v462
    %1229 = vmatpush1.msra.mxu0 %v461
    %1230 = vmatprep.subr.mxu0 %v458
    %1231 = vmatpush1.msra.mxu0 %v457
    %1232 = vmatprep.subr.mxu0 %v454
    %1233 = vmatpush1.msra.mxu0 %v453
    %1234 = vmatprep.subr.mxu0 %v450
    %1235 = vmatpush1.msra.mxu0 %v449
    %1236 = vmatprep.subr.mxu0 %v446
    %1237 = vmatpush1.msra.mxu0 %v445
    %1238 = vmatprep.subr.mxu0 %v442
    %1239 = vmatpush1.msra.mxu0 %v441
    %1240 = vmatprep.subr.mxu0 %v438
    %1241 = vmatpush1.msra.mxu0 %v437
    %1242 = vmatprep.subr.mxu0 %v434
    %1243 = vmatpush1.msra.mxu0 %v433
    %1244 = vmatprep.subr.mxu0 %v430
    %1245 = vmatpush1.msra.mxu0 %v429
    %1246 = vmatprep.subr.mxu0 %v426
    %1247 = vmatpush1.msra.mxu0 %v425
    %1248 = vmatprep.subr.mxu0 %v422
    %1249 = vmatpush1.msra.mxu0 %v421
    %1250 = vmatprep.subr.mxu0 %v418
    %1251 = vmatpush1.msra.mxu0 %v417
    %1252 = vmatprep.subr.mxu0 %v414
    %1253 = vmatpush1.msra.mxu0 %v413
    %1254 = vmatprep.subr.mxu0 %v410
    %1255 = vmatpush1.msra.mxu0 %v409
    %1256 = vmatprep.subr.mxu0 %v406
    %1257 = vmatpush1.msra.mxu0 %v405
    %1258 = vmatprep.subr.mxu0 %v402
    %1259 = vmatpush1.msra.mxu0 %v401
    %1260 = vmatprep.subr.mxu0 %v526
    %1261 = vmatpush2.msra.mxu0 %v525
    %1262 = vmatprep.subr.mxu0 %v522
    %1263 = vmatpush2.msra.mxu0 %v521
    %1264 = vmatprep.subr.mxu0 %v518
    %1265 = vmatpush2.msra.mxu0 %v517
    %1266 = vmatprep.subr.mxu0 %v514
    %1267 = vmatpush2.msra.mxu0 %v513
    %1268 = vmatprep.subr.mxu0 %v510
    %1269 = vmatpush2.msra.mxu0 %v509
    %1270 = vmatprep.subr.mxu0 %v506
    %1271 = vmatpush2.msra.mxu0 %v505
    %1272 = vmatprep.subr.mxu0 %v502
    %1273 = vmatpush2.msra.mxu0 %v501
    %1274 = vmatprep.subr.mxu0 %v498
    %1275 = vmatpush2.msra.mxu0 %v497
    %1276 = vmatprep.subr.mxu0 %v494
    %1277 = vmatpush2.msra.mxu0 %v493
    %1278 = vmatprep.subr.mxu0 %v490
    %1279 = vmatpush2.msra.mxu0 %v489
    %1280 = vmatprep.subr.mxu0 %v486
    %1281 = vmatpush2.msra.mxu0 %v485
    %1282 = vmatprep.subr.mxu0 %v482
    %1283 = vmatpush2.msra.mxu0 %v481
    %1284 = vmatprep.subr.mxu0 %v478
    %1285 = vmatpush2.msra.mxu0 %v477
    %1286 = vmatprep.subr.mxu0 %v474
    %1287 = vmatpush2.msra.mxu0 %v473
    %1288 = vmatprep.subr.mxu0 %v470
    %1289 = vmatpush2.msra.mxu0 %v469
    %1290 = vmatprep.subr.mxu0 %v466
    %1291 = vmatpush2.msra.mxu0 %v465
    %1292 = vmatprep.mubr.f32.mxu0 %v1204
    %1293 = vmatmul.mubr.f32.gmra.mxu0 %v1203
    %v1294 = vpop.f32.mrf.mxu0
    %v1295 = vadd.f32 %v1211, %v1294
    %v1296 = vpop.f32.mrf.mxu0
    %v1297 = vadd.f32 %v1215, %v1296
    %1298 = vdwg.mxu0
    %1299 = vmatprep.subr.mxu0 %v590
    %1300 = vmatpush1.msra.mxu0 %v589
    %1301 = vmatprep.subr.mxu0 %v586
    %1302 = vmatpush1.msra.mxu0 %v585
    %1303 = vmatprep.subr.mxu0 %v582
    %1304 = vmatpush1.msra.mxu0 %v581
    %1305 = vmatprep.subr.mxu0 %v578
    %1306 = vmatpush1.msra.mxu0 %v577
    %1307 = vmatprep.subr.mxu0 %v574
    %1308 = vmatpush1.msra.mxu0 %v573
    %1309 = vmatprep.subr.mxu0 %v570
    %1310 = vmatpush1.msra.mxu0 %v569
    %1311 = vmatprep.subr.mxu0 %v566
    %1312 = vmatpush1.msra.mxu0 %v565
    %1313 = vmatprep.subr.mxu0 %v562
    %1314 = vmatpush1.msra.mxu0 %v561
    %1315 = vmatprep.subr.mxu0 %v558
    %1316 = vmatpush1.msra.mxu0 %v557
    %1317 = vmatprep.subr.mxu0 %v554
    %1318 = vmatpush1.msra.mxu0 %v553
    %1319 = vmatprep.subr.mxu0 %v550
    %1320 = vmatpush1.msra.mxu0 %v549
    %1321 = vmatprep.subr.mxu0 %v546
    %1322 = vmatpush1.msra.mxu0 %v545
    %1323 = vmatprep.subr.mxu0 %v542
    %1324 = vmatpush1.msra.mxu0 %v541
    %1325 = vmatprep.subr.mxu0 %v538
    %1326 = vmatpush1.msra.mxu0 %v537
    %1327 = vmatprep.subr.mxu0 %v534
    %1328 = vmatpush1.msra.mxu0 %v533
    %1329 = vmatprep.subr.mxu0 %v530
    %1330 = vmatpush1.msra.mxu0 %v529
    %1331 = vmatprep.subr.mxu0 %v654
    %1332 = vmatpush2.msra.mxu0 %v653
    %1333 = vmatprep.subr.mxu0 %v650
    %1334 = vmatpush2.msra.mxu0 %v649
    %1335 = vmatprep.subr.mxu0 %v646
    %1336 = vmatpush2.msra.mxu0 %v645
    %1337 = vmatprep.subr.mxu0 %v642
    %1338 = vmatpush2.msra.mxu0 %v641
    %1339 = vmatprep.subr.mxu0 %v638
    %1340 = vmatpush2.msra.mxu0 %v637
    %1341 = vmatprep.subr.mxu0 %v634
    %1342 = vmatpush2.msra.mxu0 %v633
    %1343 = vmatprep.subr.mxu0 %v630
    %1344 = vmatpush2.msra.mxu0 %v629
    %1345 = vmatprep.subr.mxu0 %v626
    %1346 = vmatpush2.msra.mxu0 %v625
    %1347 = vmatprep.subr.mxu0 %v622
    %1348 = vmatpush2.msra.mxu0 %v621
    %1349 = vmatprep.subr.mxu0 %v618
    %1350 = vmatpush2.msra.mxu0 %v617
    %1351 = vmatprep.subr.mxu0 %v614
    %1352 = vmatpush2.msra.mxu0 %v613
    %1353 = vmatprep.subr.mxu0 %v610
    %1354 = vmatpush2.msra.mxu0 %v609
    %1355 = vmatprep.subr.mxu0 %v606
    %1356 = vmatpush2.msra.mxu0 %v605
    %1357 = vmatprep.subr.mxu0 %v602
    %1358 = vmatpush2.msra.mxu0 %v601
    %1359 = vmatprep.subr.mxu0 %v598
    %1360 = vmatpush2.msra.mxu0 %v597
    %1361 = vmatprep.subr.mxu0 %v594
    %1362 = vmatpush2.msra.mxu0 %v593
    %1363 = vmatprep.mubr.f32.mxu0 %v1206
    %1364 = vmatmul.mubr.f32.gmra.mxu0 %v1205
    %v1365 = vpop.f32.mrf.mxu0
    %v1366 = vadd.f32 %v1295, %v1365
    %v1367 = vpop.f32.mrf.mxu0
    %v1368 = vadd.f32 %v1297, %v1367
    %1369 = vdwg.mxu0
    %1370 = vmatprep.subr.mxu0 %v464
    %1371 = vmatpush1.msra.mxu0 %v463
    %1372 = vmatprep.subr.mxu0 %v460
    %1373 = vmatpush1.msra.mxu0 %v459
    %1374 = vmatprep.subr.mxu0 %v456
    %1375 = vmatpush1.msra.mxu0 %v455
    %1376 = vmatprep.subr.mxu0 %v452
    %1377 = vmatpush1.msra.mxu0 %v451
    %1378 = vmatprep.subr.mxu0 %v448
    %1379 = vmatpush1.msra.mxu0 %v447
    %1380 = vmatprep.subr.mxu0 %v444
    %1381 = vmatpush1.msra.mxu0 %v443
    %1382 = vmatprep.subr.mxu0 %v440
    %1383 = vmatpush1.msra.mxu0 %v439
    %1384 = vmatprep.subr.mxu0 %v436
    %1385 = vmatpush1.msra.mxu0 %v435
    %1386 = vmatprep.subr.mxu0 %v432
    %1387 = vmatpush1.msra.mxu0 %v431
    %1388 = vmatprep.subr.mxu0 %v428
    %1389 = vmatpush1.msra.mxu0 %v427
    %1390 = vmatprep.subr.mxu0 %v424
    %1391 = vmatpush1.msra.mxu0 %v423
    %1392 = vmatprep.subr.mxu0 %v420
    %1393 = vmatpush1.msra.mxu0 %v419
    %1394 = vmatprep.subr.mxu0 %v416
    %1395 = vmatpush1.msra.mxu0 %v415
    %1396 = vmatprep.subr.mxu0 %v412
    %1397 = vmatpush1.msra.mxu0 %v411
    %1398 = vmatprep.subr.mxu0 %v408
    %1399 = vmatpush1.msra.mxu0 %v407
    %1400 = vmatprep.subr.mxu0 %v404
    %1401 = vmatpush1.msra.mxu0 %v403
    %1402 = vmatprep.subr.mxu0 %v528
    %1403 = vmatpush2.msra.mxu0 %v527
    %1404 = vmatprep.subr.mxu0 %v524
    %1405 = vmatpush2.msra.mxu0 %v523
    %1406 = vmatprep.subr.mxu0 %v520
    %1407 = vmatpush2.msra.mxu0 %v519
    %1408 = vmatprep.subr.mxu0 %v516
    %1409 = vmatpush2.msra.mxu0 %v515
    %1410 = vmatprep.subr.mxu0 %v512
    %1411 = vmatpush2.msra.mxu0 %v511
    %1412 = vmatprep.subr.mxu0 %v508
    %1413 = vmatpush2.msra.mxu0 %v507
    %1414 = vmatprep.subr.mxu0 %v504
    %1415 = vmatpush2.msra.mxu0 %v503
    %1416 = vmatprep.subr.mxu0 %v500
    %1417 = vmatpush2.msra.mxu0 %v499
    %1418 = vmatprep.subr.mxu0 %v496
    %1419 = vmatpush2.msra.mxu0 %v495
    %1420 = vmatprep.subr.mxu0 %v492
    %1421 = vmatpush2.msra.mxu0 %v491
    %1422 = vmatprep.subr.mxu0 %v488
    %1423 = vmatpush2.msra.mxu0 %v487
    %1424 = vmatprep.subr.mxu0 %v484
    %1425 = vmatpush2.msra.mxu0 %v483
    %1426 = vmatprep.subr.mxu0 %v480
    %1427 = vmatpush2.msra.mxu0 %v479
    %1428 = vmatprep.subr.mxu0 %v476
    %1429 = vmatpush2.msra.mxu0 %v475
    %1430 = vmatprep.subr.mxu0 %v472
    %1431 = vmatpush2.msra.mxu0 %v471
    %1432 = vmatprep.subr.mxu0 %v468
    %1433 = vmatpush2.msra.mxu0 %v467
    %1434 = vmatprep.mubr.f32.mxu0 %v1204
    %1435 = vmatmul.mubr.f32.gmra.mxu0 %v1203
    %v1436 = vpop.f32.mrf.mxu0
    %v1437 = vadd.f32 %v1219, %v1436
    %v1438 = vpop.f32.mrf.mxu0
    %v1439 = vadd.f32 %v1223, %v1438
    %1440 = vdwg.mxu0
    %1441 = vmatprep.subr.mxu0 %v592
    %1442 = vmatpush1.msra.mxu0 %v591
    %1443 = vmatprep.subr.mxu0 %v588
    %1444 = vmatpush1.msra.mxu0 %v587
    %1445 = vmatprep.subr.mxu0 %v584
    %1446 = vmatpush1.msra.mxu0 %v583
    %1447 = vmatprep.subr.mxu0 %v580
    %1448 = vmatpush1.msra.mxu0 %v579
    %1449 = vmatprep.subr.mxu0 %v576
    %1450 = vmatpush1.msra.mxu0 %v575
    %1451 = vmatprep.subr.mxu0 %v572
    %1452 = vmatpush1.msra.mxu0 %v571
    %1453 = vmatprep.subr.mxu0 %v568
    %1454 = vmatpush1.msra.mxu0 %v567
    %1455 = vmatprep.subr.mxu0 %v564
    %1456 = vmatpush1.msra.mxu0 %v563
    %1457 = vmatprep.subr.mxu0 %v560
    %1458 = vmatpush1.msra.mxu0 %v559
    %1459 = vmatprep.subr.mxu0 %v556
    %1460 = vmatpush1.msra.mxu0 %v555
    %1461 = vmatprep.subr.mxu0 %v552
    %1462 = vmatpush1.msra.mxu0 %v551
    %1463 = vmatprep.subr.mxu0 %v548
    %1464 = vmatpush1.msra.mxu0 %v547
    %1465 = vmatprep.subr.mxu0 %v544
    %1466 = vmatpush1.msra.mxu0 %v543
    %1467 = vmatprep.subr.mxu0 %v540
    %1468 = vmatpush1.msra.mxu0 %v539
    %1469 = vmatprep.subr.mxu0 %v536
    %1470 = vmatpush1.msra.mxu0 %v535
    %1471 = vmatprep.subr.mxu0 %v532
    %1472 = vmatpush1.msra.mxu0 %v531
    %1473 = vmatprep.subr.mxu0 %v656
    %1474 = vmatpush2.msra.mxu0 %v655
    %1475 = vmatprep.subr.mxu0 %v652
    %1476 = vmatpush2.msra.mxu0 %v651
    %1477 = vmatprep.subr.mxu0 %v648
    %1478 = vmatpush2.msra.mxu0 %v647
    %1479 = vmatprep.subr.mxu0 %v644
    %1480 = vmatpush2.msra.mxu0 %v643
    %1481 = vmatprep.subr.mxu0 %v640
    %1482 = vmatpush2.msra.mxu0 %v639
    %1483 = vmatprep.subr.mxu0 %v636
    %1484 = vmatpush2.msra.mxu0 %v635
    %1485 = vmatprep.subr.mxu0 %v632
    %1486 = vmatpush2.msra.mxu0 %v631
    %1487 = vmatprep.subr.mxu0 %v628
    %1488 = vmatpush2.msra.mxu0 %v627
    %1489 = vmatprep.subr.mxu0 %v624
    %1490 = vmatpush2.msra.mxu0 %v623
    %1491 = vmatprep.subr.mxu0 %v620
    %1492 = vmatpush2.msra.mxu0 %v619
    %1493 = vmatprep.subr.mxu0 %v616
    %1494 = vmatpush2.msra.mxu0 %v615
    %1495 = vmatprep.subr.mxu0 %v612
    %1496 = vmatpush2.msra.mxu0 %v611
    %1497 = vmatprep.subr.mxu0 %v608
    %1498 = vmatpush2.msra.mxu0 %v607
    %1499 = vmatprep.subr.mxu0 %v604
    %1500 = vmatpush2.msra.mxu0 %v603
    %1501 = vmatprep.subr.mxu0 %v600
    %1502 = vmatpush2.msra.mxu0 %v599
    %1503 = vmatprep.subr.mxu0 %v596
    %1504 = vmatpush2.msra.mxu0 %v595
    %1505 = vmatprep.mubr.f32.mxu0 %v1206
    %1506 = vmatmul.mubr.f32.gmra.mxu0 %v1205
    %v1507 = vpop.f32.mrf.mxu0
    %v1508 = vadd.f32 %v1437, %v1507
    %v1509 = vpop.f32.mrf.mxu0
    %v1510 = vadd.f32 %v1439, %v1509
    %1511 = vdwg.mxu0
    %v1512 = vmax.f32 %v1366, 0.0
    %v1513 = vmax.f32 %v1368, 0.0
    %v1514 = vmax.f32 %v1508, 0.0
    %v1515 = vmax.f32 %v1510, 0.0
    %v1517 = vlaneseq
    %v1518 = vshrl.u32 %v1517, 7
    %v1519 = vsub.s32 0, %v1518
    %v1520 = vrot.slane %v722, %v1519
    %1522 = vmatprep.subr.mxu0 0.0
    %1523 = vmatpush1.msra.mxu0 %v673
    %1524 = vmatprep.subr.mxu0 0.0
    %1525 = vmatpush1.msra.mxu0 %v672
    %1526 = vmatprep.subr.mxu0 0.0
    %1527 = vmatpush1.msra.mxu0 %v671
    %1528 = vmatprep.subr.mxu0 0.0
    %1529 = vmatpush1.msra.mxu0 %v670
    %1530 = vmatprep.subr.mxu0 0.0
    %1531 = vmatpush1.msra.mxu0 %v669
    %1532 = vmatprep.subr.mxu0 0.0
    %1533 = vmatpush1.msra.mxu0 %v668
    %1534 = vmatprep.subr.mxu0 0.0
    %1535 = vmatpush1.msra.mxu0 %v667
    %1536 = vmatprep.subr.mxu0 0.0
    %1537 = vmatpush1.msra.mxu0 %v666
    %1538 = vmatprep.subr.mxu0 0.0
    %1539 = vmatpush1.msra.mxu0 %v665
    %1540 = vmatprep.subr.mxu0 0.0
    %1541 = vmatpush1.msra.mxu0 %v664
    %1542 = vmatprep.subr.mxu0 0.0
    %1543 = vmatpush1.msra.mxu0 %v663
    %1544 = vmatprep.subr.mxu0 0.0
    %1545 = vmatpush1.msra.mxu0 %v662
    %1546 = vmatprep.subr.mxu0 0.0
    %1547 = vmatpush1.msra.mxu0 %v661
    %1548 = vmatprep.subr.mxu0 0.0
    %1549 = vmatpush1.msra.mxu0 %v660
    %1550 = vmatprep.subr.mxu0 0.0
    %1551 = vmatpush1.msra.mxu0 %v659
    %1552 = vmatprep.subr.mxu0 0.0
    %1553 = vmatpush1.msra.mxu0 %v658
    %1554 = vmatprep.subr.mxu0 0.0
    %1555 = vmatpush2.msra.mxu0 %v689
    %1556 = vmatprep.subr.mxu0 0.0
    %1557 = vmatpush2.msra.mxu0 %v688
    %1558 = vmatprep.subr.mxu0 0.0
    %1559 = vmatpush2.msra.mxu0 %v687
    %1560 = vmatprep.subr.mxu0 0.0
    %1561 = vmatpush2.msra.mxu0 %v686
    %1562 = vmatprep.subr.mxu0 0.0
    %1563 = vmatpush2.msra.mxu0 %v685
    %1564 = vmatprep.subr.mxu0 0.0
    %1565 = vmatpush2.msra.mxu0 %v684
    %1566 = vmatprep.subr.mxu0 0.0
    %1567 = vmatpush2.msra.mxu0 %v683
    %1568 = vmatprep.subr.mxu0 0.0
    %1569 = vmatpush2.msra.mxu0 %v682
    %1570 = vmatprep.subr.mxu0 0.0
    %1571 = vmatpush2.msra.mxu0 %v681
    %1572 = vmatprep.subr.mxu0 0.0
    %1573 = vmatpush2.msra.mxu0 %v680
    %1574 = vmatprep.subr.mxu0 0.0
    %1575 = vmatpush2.msra.mxu0 %v679
    %1576 = vmatprep.subr.mxu0 0.0
    %1577 = vmatpush2.msra.mxu0 %v678
    %1578 = vmatprep.subr.mxu0 0.0
    %1579 = vmatpush2.msra.mxu0 %v677
    %1580 = vmatprep.subr.mxu0 0.0
    %1581 = vmatpush2.msra.mxu0 %v676
    %1582 = vmatprep.subr.mxu0 0.0
    %1583 = vmatpush2.msra.mxu0 %v675
    %1584 = vmatprep.subr.mxu0 0.0
    %1585 = vmatpush2.msra.mxu0 %v674
    %1586 = vmatprep.mubr.f32.mxu0 %v1513
    %1587 = vmatmul.mubr.f32.gmra.mxu0 %v1512
    %v1588 = vpop.f32.mrf.mxu0
    %v1589 = vadd.f32 %v1520, %v1588
    %v1590 = vpop.f32.mrf.mxu0
    %1591 = vdwg.mxu0
    %1592 = vmatprep.subr.mxu0 0.0
    %1593 = vmatpush1.msra.mxu0 %v705
    %1594 = vmatprep.subr.mxu0 0.0
    %1595 = vmatpush1.msra.mxu0 %v704
    %1596 = vmatprep.subr.mxu0 0.0
    %1597 = vmatpush1.msra.mxu0 %v703
    %1598 = vmatprep.subr.mxu0 0.0
    %1599 = vmatpush1.msra.mxu0 %v702
    %1600 = vmatprep.subr.mxu0 0.0
    %1601 = vmatpush1.msra.mxu0 %v701
    %1602 = vmatprep.subr.mxu0 0.0
    %1603 = vmatpush1.msra.mxu0 %v700
    %1604 = vmatprep.subr.mxu0 0.0
    %1605 = vmatpush1.msra.mxu0 %v699
    %1606 = vmatprep.subr.mxu0 0.0
    %1607 = vmatpush1.msra.mxu0 %v698
    %1608 = vmatprep.subr.mxu0 0.0
    %1609 = vmatpush1.msra.mxu0 %v697
    %1610 = vmatprep.subr.mxu0 0.0
    %1611 = vmatpush1.msra.mxu0 %v696
    %1612 = vmatprep.subr.mxu0 0.0
    %1613 = vmatpush1.msra.mxu0 %v695
    %1614 = vmatprep.subr.mxu0 0.0
    %1615 = vmatpush1.msra.mxu0 %v694
    %1616 = vmatprep.subr.mxu0 0.0
    %1617 = vmatpush1.msra.mxu0 %v693
    %1618 = vmatprep.subr.mxu0 0.0
    %1619 = vmatpush1.msra.mxu0 %v692
    %1620 = vmatprep.subr.mxu0 0.0
    %1621 = vmatpush1.msra.mxu0 %v691
    %1622 = vmatprep.subr.mxu0 0.0
    %1623 = vmatpush1.msra.mxu0 %v690
    %1624 = vmatprep.subr.mxu0 0.0
    %1625 = vmatpush2.msra.mxu0 %v721
    %1626 = vmatprep.subr.mxu0 0.0
    %1627 = vmatpush2.msra.mxu0 %v720
    %1628 = vmatprep.subr.mxu0 0.0
    %1629 = vmatpush2.msra.mxu0 %v719
    %1630 = vmatprep.subr.mxu0 0.0
    %1631 = vmatpush2.msra.mxu0 %v718
    %1632 = vmatprep.subr.mxu0 0.0
    %1633 = vmatpush2.msra.mxu0 %v717
    %1634 = vmatprep.subr.mxu0 0.0
    %1635 = vmatpush2.msra.mxu0 %v716
    %1636 = vmatprep.subr.mxu0 0.0
    %1637 = vmatpush2.msra.mxu0 %v715
    %1638 = vmatprep.subr.mxu0 0.0
    %1639 = vmatpush2.msra.mxu0 %v714
    %1640 = vmatprep.subr.mxu0 0.0
    %1641 = vmatpush2.msra.mxu0 %v713
    %1642 = vmatprep.subr.mxu0 0.0
    %1643 = vmatpush2.msra.mxu0 %v712
    %1644 = vmatprep.subr.mxu0 0.0
    %1645 = vmatpush2.msra.mxu0 %v711
    %1646 = vmatprep.subr.mxu0 0.0
    %1647 = vmatpush2.msra.mxu0 %v710
    %1648 = vmatprep.subr.mxu0 0.0
    %1649 = vmatpush2.msra.mxu0 %v709
    %1650 = vmatprep.subr.mxu0 0.0
    %1651 = vmatpush2.msra.mxu0 %v708
    %1652 = vmatprep.subr.mxu0 0.0
    %1653 = vmatpush2.msra.mxu0 %v707
    %1654 = vmatprep.subr.mxu0 0.0
    %1655 = vmatpush2.msra.mxu0 %v706
    %1656 = vmatprep.mubr.f32.mxu0 %v1515
    %1657 = vmatmul.mubr.f32.gmra.mxu0 %v1514
    %v1658 = vpop.f32.mrf.mxu0
    %v1659 = vadd.f32 %v1589, %v1658
    %v1660 = vpop.f32.mrf.mxu0
    %1661 = vdwg.mxu0
    %1662 = vadd.xlane.f32.xlu0 %v1659
    %v1663 = vpop.xlane.xlu0 %1662
    %v1664 = vsub.f32 %v1663, %v1659
    %v1665 = vmul.f32 %v1664, 0.125
    %v1666 = vsub.f32 %v1659, %v1665
    %1668 = vset.pattern.permute.xlu0 127
    %1669 = vperm.xlu0 %1668, %v1666
    %v1670 = vpop.permute.xlu0 %1669
    %v1672 = vadd.f32 %v1659, %v1670
    %v1673 = vsel %vm725, %v1672, 0.0
    %1674 = vst [vmem:[#allocation13] sm:$0xff] %v1673
    // Predicated region
    $region62: #{tpu_custom_call.1} parent=1 // pred_check
      _
    $region63: #{tpu_custom_call.1} parent=1 // pred_check_branch
      %1676 = sbr.rel (0) target = $region65
    $region64: #{tpu_custom_call.1} parent=1 // pred_region
      %s1678 = ssub.s32 128, 128
      %1679 = vsyncadd [#allocation4], %s1678
      %s1681 = sshll.u32 [#allocation13], 4
      %s1682 = int_to_ptr.vmem [resolvable:$true] %s1681
      %1684 = dma.vmem_to_hbm [thread:$0]  %s1682, 128, %s9, [#allocation4]
    $region65: #{tpu_custom_call.1} parent=1 // pred_fallthru
      _
    // Predicated region
    $region66: #{tpu_custom_call.1} parent=1 // pred_check
      _
    $region67: #{tpu_custom_call.1} parent=1 // pred_check_branch
      %1686 = sbr.rel (0) target = $region69
    $region68: #{tpu_custom_call.1} parent=1 // pred_region
      %1687 = dma.done [#allocation4], 128
    $region69: #{tpu_custom_call.1} parent=1 // pred_fallthru
      _
    %1688 = vsyncpa [#allocation3], 1
    %1689 = vsyncpa [#allocation6], 1
    %1690 = vsyncpa [#allocation9], 1
    %1691 = vsyncpa [#allocation12], 1
    %1692 = vsyncpa [#allocation4], 1

</llo_original>
